<compile_context>
chip_gen: v7x
topology: tpu7x:2x2x1
jax: 0.10.0
libtpu: 0.0.40
codegen_flags: <defaults>
</compile_context>

<pallas_src>
import functools
import math

import jax
import jax.numpy as jnp
from jax.experimental import pallas as pl
from jax.experimental.pallas import tpu as pltpu


def _round_up(n, m):
    return (n + m - 1) // m * m


# ---------------------------------------------------------------------------
# Fused encoder kernel: (x + pe) -> [FFN + residual + LayerNorm] x L,
# plus last-layer attention probabilities.  One grid step per batch element.
# ---------------------------------------------------------------------------
def _make_encoder_kernel(num_layers, num_heads, head_dim, eps):
    hidden = num_heads * head_dim
    scale = 1.0 / math.sqrt(head_dim)

    def kernel(*refs):
        # inputs: x, pe, mask, w_qk(last layer), b_qk(last layer),
        #         then 6 refs per layer: w1, b1, w2, b2, gamma, beta
        x_ref, pe_ref, mask_ref, w_qk_ref, b_qk_ref = refs[:5]
        layer_refs = refs[5:5 + 6 * num_layers]
        out_ref = refs[5 + 6 * num_layers]
        probs_ref = refs[5 + 6 * num_layers + 1]

        s_pad = x_ref.shape[1]          # padded sequence rows (multiple of 8)
        lane = probs_ref.shape[3]       # padded key/lane width (multiple of 128)

        x = x_ref[0] + pe_ref[0]        # [S_pad, H] f32, positional add fused
        mask = mask_ref[0, 0]           # [1, LANE] additive mask (padded keys = -1e9)

        for l in range(num_layers):
            w1, b1, w2, b2, gamma, beta = layer_refs[6 * l:6 * l + 6]

            if l == num_layers - 1:
                # --- last-layer attention probabilities: the only attention
                #     output Encoder_1d consumes (ctx / V / SelfOutput are dead) ---
                qk = jnp.dot(x.astype(jnp.bfloat16), w_qk_ref[...],
                             preferred_element_type=jnp.float32) + b_qk_ref[...]
                # Fold 1/sqrt(dh) into Q once (cheaper than scaling scores).
                q = (qk[:, :hidden] * scale).astype(jnp.bfloat16)        # [S_pad, H]
                k = qk[:, hidden:]                                       # [S_pad, H] f32
                if lane > s_pad:
                    # Zero-pad keys so the probs store is a full 128-lane store;
                    # the padded mask drives their probabilities to exactly 0.
                    k = jnp.concatenate(
                        [k, jnp.zeros((lane - s_pad, hidden), k.dtype)], axis=0)
                k = k.astype(jnp.bfloat16)                               # [LANE, H]
                for h in range(num_heads):                               # static unroll
                    sl = slice(h * head_dim, (h + 1) * head_dim)
                    s = jnp.einsum("qd,kd->qk", q[:, sl], k[:, sl],
                                   preferred_element_type=jnp.float32)   # [S_pad, LANE]
                    s = s + mask
                    m = jnp.max(s, axis=-1, keepdims=True)
                    e = jnp.exp(s - m)                                   # f32 softmax
                    p = e / jnp.sum(e, axis=-1, keepdims=True)           # exact divide
                    probs_ref[0, h] = p.astype(probs_ref.dtype)          # lane-dense store
                    # attention-probs dropout = identity (eval)

            # --- FFN + residual + LayerNorm: the only path feeding x forward ---
            hmid = jnp.dot(x.astype(jnp.bfloat16), w1[...],
                           preferred_element_type=jnp.float32) + b1[...]  # [S_pad, I]
            hmid = jnp.maximum(hmid, 0.0)
            y = jnp.dot(hmid.astype(jnp.bfloat16), w2[...],
                        preferred_element_type=jnp.float32) + b2[...]     # [S_pad, H]
            y = x + y                        # residual; hidden dropout = identity (eval)
            u = jnp.mean(y, axis=-1, keepdims=True)
            d = y - u
            var = jnp.mean(d * d, axis=-1, keepdims=True)
            x = d * jax.lax.rsqrt(var + eps) * gamma[...] + beta[...]

        out_ref[0] = x.astype(out_ref.dtype)

    return kernel


# ---------------------------------------------------------------------------
# Wrapper
# ---------------------------------------------------------------------------
def encoder_1d_forward(x, mask, params, *, num_heads, probs_dtype=jnp.float32,
                       eps=1e-5):
    """Encoder_1d.forward: returns (x [B,S,H], attn_probs of last layer)."""
    B, S, H = x.shape
    layers = params["layers"]
    L = len(layers)
    assert H % num_heads == 0
    dh = H // num_heads

    s_pad = _round_up(S, 8)            # sublane-aligned row padding (50 -> 56)
    lane = _round_up(s_pad, 128)       # lane-dense key/probs padding (-> 128)

    # Faithful to PositionalEncoding.forward: pe[:x.size(0)] slices the size-1
    # leading dim (works because pe's leading dim is 1 and S == max_len == 50).
    pos = params["pe"][: x.shape[0]]
    pos = jnp.pad(pos, ((0, 0), (0, s_pad - pos.shape[1]), (0, 0)))
    x_pad = jnp.pad(x, ((0, 0), (0, s_pad - S), (0, 0)))
    mask_pad = jnp.pad(mask, ((0, 0), (0, 0), (0, 0), (0, lane - mask.shape[-1])),
                       constant_values=-1e9)          # padded keys masked out

    last = layers[-1]
    inputs = [x_pad, pos, mask_pad, last["w_qk"], last["b_qk"]]
    in_specs = [
        pl.BlockSpec((1, s_pad, H), lambda b: (b, 0, 0)),
        pl.BlockSpec((1, s_pad, H), lambda b: (0, 0, 0)),        # resident
        pl.BlockSpec((1, 1, 1, lane), lambda b: (b, 0, 0, 0)),
        pl.BlockSpec((H, 2 * H), lambda b: (0, 0)),              # resident weights
        pl.BlockSpec((1, 2 * H), lambda b: (0, 0)),
    ]
    for lp in layers:
        inter = lp["w1"].shape[1]
        inputs += [lp["w1"], lp["b1"], lp["w2"], lp["b2"], lp["gamma"], lp["beta"]]
        in_specs += [
            pl.BlockSpec((H, inter), lambda b: (0, 0)),
            pl.BlockSpec((1, inter), lambda b: (0, 0)),
            pl.BlockSpec((inter, H), lambda b: (0, 0)),
            pl.BlockSpec((1, H), lambda b: (0, 0)),
            pl.BlockSpec((1, H), lambda b: (0, 0)),
            pl.BlockSpec((1, H), lambda b: (0, 0)),
        ]

    kernel = _make_encoder_kernel(num_layers=L, num_heads=num_heads,
                                  head_dim=dh, eps=eps)
    out_pad, probs_pad = pl.pallas_call(
        kernel,
        out_shape=(jax.ShapeDtypeStruct((B, s_pad, H), jnp.float32),
                   jax.ShapeDtypeStruct((B, num_heads, s_pad, lane), probs_dtype)),
        grid_spec=pltpu.PrefetchScalarGridSpec(
            num_scalar_prefetch=0,
            grid=(B,),
            in_specs=in_specs,
            out_specs=(pl.BlockSpec((1, s_pad, H), lambda b: (b, 0, 0)),
                       pl.BlockSpec((1, num_heads, s_pad, lane),
                                    lambda b: (b, 0, 0, 0)))),
        compiler_params=pltpu.CompilerParams(
            dimension_semantics=("parallel",)),
    )(*inputs)

    return out_pad[:, :S, :], probs_pad[:, :, :S, :S]


def make_positional_encoding(max_len, d_model):
    position = jnp.arange(max_len, dtype=jnp.float32)[:, None]
    div_term = jnp.exp(jnp.arange(0, d_model, 2, dtype=jnp.float32)
                       * (-math.log(10000.0) / d_model))
    pe = jnp.zeros((max_len, d_model), jnp.float32)
    pe = pe.at[:, 0::2].set(jnp.sin(position * div_term))
    pe = pe.at[:, 1::2].set(jnp.cos(position * div_term))
    return pe[None]                                      # [1, max_len, d_model]


# ---------------------------------------------------------------------------
# Plain-JAX reference mirroring the kernel's bf16-operand / f32-accumulate math
# ---------------------------------------------------------------------------
def _reference_encoder(x, mask, params, num_heads, eps=1e-5):
    pos = params["pe"][: x.shape[0]]
    x = x + pos
    B, S, H = x.shape
    dh = H // num_heads
    scale = 1.0 / math.sqrt(dh)
    layers = params["layers"]
    probs = None
    for idx, lp in enumerate(layers):
        if idx == len(layers) - 1:
            qk = (jnp.einsum("bsh,hd->bsd", x.astype(jnp.bfloat16), lp["w_qk"],
                             preferred_element_type=jnp.float32) + lp["b_qk"])
            q = (qk[..., :H] * scale).astype(jnp.bfloat16)
            k = qk[..., H:].astype(jnp.bfloat16)
            qh = q.reshape(B, S, num_heads, dh).transpose(0, 2, 1, 3)
            kh = k.reshape(B, S, num_heads, dh).transpose(0, 2, 1, 3)
            scores = jnp.einsum("bhqd,bhkd->bhqk", qh, kh,
                                preferred_element_type=jnp.float32) + mask
            probs = jax.nn.softmax(scores, axis=-1)
        h = (jnp.einsum("bsh,hi->bsi", x.astype(jnp.bfloat16), lp["w1"],
                        preferred_element_type=jnp.float32) + lp["b1"])
        h = jnp.maximum(h, 0.0)
        y = (jnp.einsum("bsi,ih->bsh", h.astype(jnp.bfloat16), lp["w2"],
                        preferred_element_type=jnp.float32) + lp["b2"])
        y = x + y
        u = y.mean(-1, keepdims=True)
        var = ((y - u) ** 2).mean(-1, keepdims=True)
        x = (y - u) * jax.lax.rsqrt(var + eps) * lp["gamma"] + lp["beta"]
    return x, probs


if __name__ == "__main__":
    # PositionalEncoding(max_len=50) inside Encoder_1d forces seq_len == 50.
    B, S, H = 2, 50, 128
    num_heads = 4
    intermediate = 256
    num_layers = 2

    key = jax.random.PRNGKey(0)
    kit = iter(jax.random.split(key, 2 + 12 * num_layers))

    def normal(k, shape, s=1.0):
        return s * jax.random.normal(k, shape, jnp.float32)

    layers = []
    for _ in range(num_layers):
        wq = normal(next(kit), (H, H), 1.0 / math.sqrt(H))      # torch [out, in]
        wk = normal(next(kit), (H, H), 1.0 / math.sqrt(H))
        bq = normal(next(kit), (H,), 0.02)
        bk = normal(next(kit), (H,), 0.02)
        w1 = normal(next(kit), (intermediate, H), 1.0 / math.sqrt(H))
        b1 = normal(next(kit), (intermediate,), 0.02)
        w2 = normal(next(kit), (H, intermediate), 1.0 / math.sqrt(intermediate))
        b2 = normal(next(kit), (H,), 0.02)
        gamma = 1.0 + normal(next(kit), (H,), 0.1)
        beta = normal(next(kit), (H,), 0.1)
        # Dead parameters (value projection, SelfOutput dense + LayerNorm,
        # layernorm1) are not materialized: EncoderLayer discards attn_output,
        # so they never affect Encoder_1d's outputs.
        layers.append({
            # Pre-transposed to [in, out], Q/K fused, bf16 so every kernel matmul
            # is a plain x @ W on the MXU with f32 accumulation.
            "w_qk": jnp.concatenate([wq.T, wk.T], axis=1).astype(jnp.bfloat16),
            "b_qk": jnp.concatenate([bq, bk]).reshape(1, 2 * H),
            "w1": w1.T.astype(jnp.bfloat16),
            "b1": b1.reshape(1, intermediate),
            "w2": w2.T.astype(jnp.bfloat16),
            "b2": b2.reshape(1, H),
            "gamma": gamma.reshape(1, H),
            "beta": beta.reshape(1, H),
        })

    params = {"pe": make_positional_encoding(50, H), "layers": layers}

    x = normal(next(kit), (B, S, H))
    keep = (jax.random.uniform(next(kit), (B, 1, 1, S)) > 0.2).astype(jnp.float32)
    attention_mask = (1.0 - keep) * -10000.0             # additive mask [B,1,1,S]

    fwd = jax.jit(functools.partial(encoder_1d_forward, num_heads=num_heads))
    x_out, attn_probs = fwd(x, attention_mask, params)
    x_out = jax.block_until_ready(x_out)
    attn_probs = jax.block_until_ready(attn_probs)

    ref_x, ref_probs = _reference_encoder(x, attention_mask, params, num_heads)

    assert x_out.shape == (B, S, H)
    assert attn_probs.shape == (B, num_heads, S, S)
    assert jnp.allclose(x_out, ref_x, atol=2e-2, rtol=2e-2), \
        float(jnp.max(jnp.abs(x_out - ref_x)))
    assert jnp.allclose(attn_probs, ref_probs, atol=2e-2, rtol=2e-2), \
        float(jnp.max(jnp.abs(attn_probs - ref_probs)))
    # Probability rows over the valid keys must sum to 1 (exact softmax divide).
    assert jnp.allclose(attn_probs.sum(-1), 1.0, atol=1e-3)

    print("KERNEL_OK")
</pallas_src>

<mosaic_0001>
module attributes {stable_mosaic.version = 11 : i64} {
  func.func @kernel(%arg0: i32, %arg1: memref<1x56x128xf32, #tpu.memory_space<vmem>>, %arg2: memref<1x56x128xf32, #tpu.memory_space<vmem>>, %arg3: memref<1x1x1x128xf32, #tpu.memory_space<vmem>>, %arg4: memref<128x256xbf16, #tpu.memory_space<vmem>>, %arg5: memref<1x256xf32, #tpu.memory_space<vmem>>, %arg6: memref<128x256xbf16, #tpu.memory_space<vmem>>, %arg7: memref<1x256xf32, #tpu.memory_space<vmem>>, %arg8: memref<256x128xbf16, #tpu.memory_space<vmem>>, %arg9: memref<1x128xf32, #tpu.memory_space<vmem>>, %arg10: memref<1x128xf32, #tpu.memory_space<vmem>>, %arg11: memref<1x128xf32, #tpu.memory_space<vmem>>, %arg12: memref<128x256xbf16, #tpu.memory_space<vmem>>, %arg13: memref<1x256xf32, #tpu.memory_space<vmem>>, %arg14: memref<256x128xbf16, #tpu.memory_space<vmem>>, %arg15: memref<1x128xf32, #tpu.memory_space<vmem>>, %arg16: memref<1x128xf32, #tpu.memory_space<vmem>>, %arg17: memref<1x128xf32, #tpu.memory_space<vmem>>, %arg18: memref<1x56x128xf32, #tpu.memory_space<vmem>>, %arg19: memref<1x4x56x128xf32, #tpu.memory_space<vmem>>) attributes {dimension_semantics = [#tpu.dimension_semantics<parallel>], iteration_bounds = array<i64: 2>, scalar_prefetch = 0 : i64, scratch_operands = 0 : i64, tpu.core_type = #tpu.core_type<tc>, window_params = [{transform_indices = @transform_0, window_bounds = array<i64: 1, 56, 128>}, {pipeline_mode = #tpu.pipeline_mode<synchronous>, transform_indices = @transform_1, window_bounds = array<i64: 1, 56, 128>}, {transform_indices = @transform_2, window_bounds = array<i64: 1, 1, 1, 128>}, {pipeline_mode = #tpu.pipeline_mode<synchronous>, transform_indices = @transform_3, window_bounds = array<i64: 128, 256>}, {pipeline_mode = #tpu.pipeline_mode<synchronous>, transform_indices = @transform_4, window_bounds = array<i64: 1, 256>}, {pipeline_mode = #tpu.pipeline_mode<synchronous>, transform_indices = @transform_5, window_bounds = array<i64: 128, 256>}, {pipeline_mode = #tpu.pipeline_mode<synchronous>, transform_indices = @transform_6, window_bounds = array<i64: 1, 256>}, {pipeline_mode = #tpu.pipeline_mode<synchronous>, transform_indices = @transform_7, window_bounds = array<i64: 256, 128>}, {pipeline_mode = #tpu.pipeline_mode<synchronous>, transform_indices = @transform_8, window_bounds = array<i64: 1, 128>}, {pipeline_mode = #tpu.pipeline_mode<synchronous>, transform_indices = @transform_9, window_bounds = array<i64: 1, 128>}, {pipeline_mode = #tpu.pipeline_mode<synchronous>, transform_indices = @transform_10, window_bounds = array<i64: 1, 128>}, {pipeline_mode = #tpu.pipeline_mode<synchronous>, transform_indices = @transform_11, window_bounds = array<i64: 128, 256>}, {pipeline_mode = #tpu.pipeline_mode<synchronous>, transform_indices = @transform_12, window_bounds = array<i64: 1, 256>}, {pipeline_mode = #tpu.pipeline_mode<synchronous>, transform_indices = @transform_13, window_bounds = array<i64: 256, 128>}, {pipeline_mode = #tpu.pipeline_mode<synchronous>, transform_indices = @transform_14, window_bounds = array<i64: 1, 128>}, {pipeline_mode = #tpu.pipeline_mode<synchronous>, transform_indices = @transform_15, window_bounds = array<i64: 1, 128>}, {pipeline_mode = #tpu.pipeline_mode<synchronous>, transform_indices = @transform_16, window_bounds = array<i64: 1, 128>}, {transform_indices = @transform_17, window_bounds = array<i64: 1, 56, 128>}, {transform_indices = @transform_18, window_bounds = array<i64: 1, 4, 56, 128>}]} {
    %c0 = arith.constant 0 : index
    %c0_0 = arith.constant 0 : index
    %c0_1 = arith.constant 0 : index
    %0 = vector.load %arg1[%c0, %c0_0, %c0_1] : memref<1x56x128xf32, #tpu.memory_space<vmem>>, vector<1x56x128xf32>
    %1 = vector.shape_cast %0 : vector<1x56x128xf32> to vector<56x128xf32>
    %c0_2 = arith.constant 0 : index
    %c0_3 = arith.constant 0 : index
    %c0_4 = arith.constant 0 : index
    %2 = vector.load %arg2[%c0_2, %c0_3, %c0_4] : memref<1x56x128xf32, #tpu.memory_space<vmem>>, vector<1x56x128xf32>
    %3 = vector.shape_cast %2 : vector<1x56x128xf32> to vector<56x128xf32>
    %4 = arith.addf %1, %3 : vector<56x128xf32>
    %c0_5 = arith.constant 0 : index
    %c0_6 = arith.constant 0 : index
    %c0_7 = arith.constant 0 : index
    %c0_8 = arith.constant 0 : index
    %5 = vector.load %arg3[%c0_5, %c0_6, %c0_7, %c0_8] : memref<1x1x1x128xf32, #tpu.memory_space<vmem>>, vector<1x1x1x128xf32>
    %6 = vector.shape_cast %5 : vector<1x1x1x128xf32> to vector<1x128xf32>
    %7 = arith.truncf %4 : vector<56x128xf32> to vector<56x128xbf16>
    %c0_9 = arith.constant 0 : index
    %c0_10 = arith.constant 0 : index
    %8 = vector.load %arg6[%c0_9, %c0_10] : memref<128x256xbf16, #tpu.memory_space<vmem>>, vector<128x256xbf16>
    %cst = arith.constant dense<0.000000e+00> : vector<56x256xf32>
    %9 = tpu.matmul %7, %8, %cst {dimension_numbers = #tpu.dot_dimension_numbers<[1], [0], [0], [1], [0, 0, 1, 1], [], []>} : vector<56x128xbf16>, vector<128x256xbf16>, vector<56x256xf32> -> vector<56x256xf32>
    %c0_11 = arith.constant 0 : index
    %c0_12 = arith.constant 0 : index
    %10 = vector.load %arg7[%c0_11, %c0_12] : memref<1x256xf32, #tpu.memory_space<vmem>>, vector<1x256xf32>
    %11 = vector.broadcast %10 : vector<1x256xf32> to vector<56x256xf32>
    %12 = arith.addf %9, %11 : vector<56x256xf32>
    %cst_13 = arith.constant 0.000000e+00 : f32
    %13 = vector.broadcast %cst_13 : f32 to vector<56x256xf32>
    %14 = arith.maximumf %12, %13 : vector<56x256xf32>
    %15 = arith.truncf %14 : vector<56x256xf32> to vector<56x256xbf16>
    %c0_14 = arith.constant 0 : index
    %c0_15 = arith.constant 0 : index
    %16 = vector.load %arg8[%c0_14, %c0_15] : memref<256x128xbf16, #tpu.memory_space<vmem>>, vector<256x128xbf16>
    %cst_16 = arith.constant dense<0.000000e+00> : vector<56x128xf32>
    %17 = tpu.matmul %15, %16, %cst_16 {dimension_numbers = #tpu.dot_dimension_numbers<[1], [0], [0], [1], [0, 0, 1, 1], [], []>} : vector<56x256xbf16>, vector<256x128xbf16>, vector<56x128xf32> -> vector<56x128xf32>
    %c0_17 = arith.constant 0 : index
    %c0_18 = arith.constant 0 : index
    %18 = vector.load %arg9[%c0_17, %c0_18] : memref<1x128xf32, #tpu.memory_space<vmem>>, vector<1x128xf32>
    %19 = vector.broadcast %18 : vector<1x128xf32> to vector<56x128xf32>
    %20 = arith.addf %17, %19 : vector<56x128xf32>
    %21 = arith.addf %4, %20 : vector<56x128xf32>
    %cst_19 = arith.constant dense<0.000000e+00> : vector<56xf32>
    %22 = vector.multi_reduction <add>, %21, %cst_19 [1] : vector<56x128xf32> to vector<56xf32>
    %23 = vector.shape_cast %22 : vector<56xf32> to vector<56x1xf32>
    %cst_20 = arith.constant 1.280000e+02 : f32
    %24 = vector.broadcast %cst_20 : f32 to vector<56x1xf32>
    %25 = arith.divf %23, %24 : vector<56x1xf32>
    %26 = vector.broadcast %25 : vector<56x1xf32> to vector<56x128xf32>
    %27 = arith.subf %21, %26 : vector<56x128xf32>
    %28 = arith.mulf %27, %27 : vector<56x128xf32>
    %cst_21 = arith.constant dense<0.000000e+00> : vector<56xf32>
    %29 = vector.multi_reduction <add>, %28, %cst_21 [1] : vector<56x128xf32> to vector<56xf32>
    %30 = vector.shape_cast %29 : vector<56xf32> to vector<56x1xf32>
    %cst_22 = arith.constant 1.280000e+02 : f32
    %31 = vector.broadcast %cst_22 : f32 to vector<56x1xf32>
    %32 = arith.divf %30, %31 : vector<56x1xf32>
    %cst_23 = arith.constant 9.99999974E-6 : f32
    %33 = vector.broadcast %cst_23 : f32 to vector<56x1xf32>
    %34 = arith.addf %32, %33 : vector<56x1xf32>
    %35 = math.rsqrt %34 : vector<56x1xf32>
    %36 = vector.broadcast %35 : vector<56x1xf32> to vector<56x128xf32>
    %37 = arith.mulf %27, %36 : vector<56x128xf32>
    %c0_24 = arith.constant 0 : index
    %c0_25 = arith.constant 0 : index
    %38 = vector.load %arg10[%c0_24, %c0_25] : memref<1x128xf32, #tpu.memory_space<vmem>>, vector<1x128xf32>
    %39 = vector.broadcast %38 : vector<1x128xf32> to vector<56x128xf32>
    %40 = arith.mulf %37, %39 : vector<56x128xf32>
    %c0_26 = arith.constant 0 : index
    %c0_27 = arith.constant 0 : index
    %41 = vector.load %arg11[%c0_26, %c0_27] : memref<1x128xf32, #tpu.memory_space<vmem>>, vector<1x128xf32>
    %42 = vector.broadcast %41 : vector<1x128xf32> to vector<56x128xf32>
    %43 = arith.addf %40, %42 : vector<56x128xf32>
    %44 = arith.truncf %43 : vector<56x128xf32> to vector<56x128xbf16>
    %c0_28 = arith.constant 0 : index
    %c0_29 = arith.constant 0 : index
    %45 = vector.load %arg4[%c0_28, %c0_29] : memref<128x256xbf16, #tpu.memory_space<vmem>>, vector<128x256xbf16>
    %cst_30 = arith.constant dense<0.000000e+00> : vector<56x256xf32>
    %46 = tpu.matmul %44, %45, %cst_30 {dimension_numbers = #tpu.dot_dimension_numbers<[1], [0], [0], [1], [0, 0, 1, 1], [], []>} : vector<56x128xbf16>, vector<128x256xbf16>, vector<56x256xf32> -> vector<56x256xf32>
    %c0_31 = arith.constant 0 : index
    %c0_32 = arith.constant 0 : index
    %47 = vector.load %arg5[%c0_31, %c0_32] : memref<1x256xf32, #tpu.memory_space<vmem>>, vector<1x256xf32>
    %48 = vector.broadcast %47 : vector<1x256xf32> to vector<56x256xf32>
    %49 = arith.addf %46, %48 : vector<56x256xf32>
    %50 = vector.extract_strided_slice %49 {offsets = [0, 0], sizes = [56, 128], strides = [1, 1]} : vector<56x256xf32> to vector<56x128xf32>
    %cst_33 = arith.constant 0.176776692 : f32
    %51 = vector.broadcast %cst_33 : f32 to vector<56x128xf32>
    %52 = arith.mulf %50, %51 : vector<56x128xf32>
    %53 = arith.truncf %52 : vector<56x128xf32> to vector<56x128xbf16>
    %54 = vector.extract_strided_slice %49 {offsets = [0, 128], sizes = [56, 128], strides = [1, 1]} : vector<56x256xf32> to vector<56x128xf32>
    %cst_34 = arith.constant 0.000000e+00 : f32
    %55 = vector.broadcast %cst_34 : f32 to vector<72x128xf32>
    %56 = tpu.concatenate %54, %55 in 0 : vector<56x128xf32>, vector<72x128xf32> -> vector<128x128xf32>
    %57 = arith.truncf %56 : vector<128x128xf32> to vector<128x128xbf16>
    %58 = vector.extract_strided_slice %53 {offsets = [0, 0], sizes = [56, 32], strides = [1, 1]} : vector<56x128xbf16> to vector<56x32xbf16>
    %59 = vector.extract_strided_slice %57 {offsets = [0, 0], sizes = [128, 32], strides = [1, 1]} : vector<128x128xbf16> to vector<128x32xbf16>
    "tpu.trace_start"() <{level = 10 : i32, message = "qd,kd->qk"}> : () -> ()
    %cst_35 = arith.constant dense<0.000000e+00> : vector<56x128xf32>
    %60 = tpu.matmul %58, %59, %cst_35 {dimension_numbers = #tpu.dot_dimension_numbers<[1], [1], [0], [0], [0, 0, 1, 0], [], []>} : vector<56x32xbf16>, vector<128x32xbf16>, vector<56x128xf32> -> vector<56x128xf32>
    "tpu.trace_stop"() : () -> ()
    %61 = vector.broadcast %6 : vector<1x128xf32> to vector<56x128xf32>
    %62 = arith.addf %60, %61 : vector<56x128xf32>
    %cst_36 = arith.constant dense<0xFF800000> : vector<56xf32>
    %63 = vector.multi_reduction <maximumf>, %62, %cst_36 [1] : vector<56x128xf32> to vector<56xf32>
    %64 = vector.shape_cast %63 : vector<56xf32> to vector<56x1xf32>
    %65 = vector.broadcast %64 : vector<56x1xf32> to vector<56x128xf32>
    %66 = arith.subf %62, %65 : vector<56x128xf32>
    %67 = math.exp %66 : vector<56x128xf32>
    %cst_37 = arith.constant dense<0.000000e+00> : vector<56xf32>
    %68 = vector.multi_reduction <add>, %67, %cst_37 [1] : vector<56x128xf32> to vector<56xf32>
    %69 = vector.shape_cast %68 : vector<56xf32> to vector<56x1xf32>
    %70 = vector.broadcast %69 : vector<56x1xf32> to vector<56x128xf32>
    %71 = arith.divf %67, %70 : vector<56x128xf32>
    %c0_38 = arith.constant 0 : index
    %c0_39 = arith.constant 0 : index
    %c0_40 = arith.constant 0 : index
    %c0_41 = arith.constant 0 : index
    %72 = vector.load %arg19[%c0_38, %c0_39, %c0_40, %c0_41] : memref<1x4x56x128xf32, #tpu.memory_space<vmem>>, vector<1x1x56x128xf32>
    %73 = vector.shape_cast %72 : vector<1x1x56x128xf32> to vector<56x128xf32>
    %74 = vector.shape_cast %71 : vector<56x128xf32> to vector<1x1x56x128xf32>
    tpu.vector_store %arg19[%c0_38, %c0_39, %c0_40, %c0_41], %74 {strides = array<i32>} : memref<1x4x56x128xf32, #tpu.memory_space<vmem>>, vector<1x1x56x128xf32>,
    %75 = vector.extract_strided_slice %53 {offsets = [0, 32], sizes = [56, 32], strides = [1, 1]} : vector<56x128xbf16> to vector<56x32xbf16>
    %76 = vector.extract_strided_slice %57 {offsets = [0, 32], sizes = [128, 32], strides = [1, 1]} : vector<128x128xbf16> to vector<128x32xbf16>
    "tpu.trace_start"() <{level = 10 : i32, message = "qd,kd->qk"}> : () -> ()
    %cst_42 = arith.constant dense<0.000000e+00> : vector<56x128xf32>
    %77 = tpu.matmul %75, %76, %cst_42 {dimension_numbers = #tpu.dot_dimension_numbers<[1], [1], [0], [0], [0, 0, 1, 0], [], []>} : vector<56x32xbf16>, vector<128x32xbf16>, vector<56x128xf32> -> vector<56x128xf32>
    "tpu.trace_stop"() : () -> ()
    %78 = vector.broadcast %6 : vector<1x128xf32> to vector<56x128xf32>
    %79 = arith.addf %77, %78 : vector<56x128xf32>
    %cst_43 = arith.constant dense<0xFF800000> : vector<56xf32>
    %80 = vector.multi_reduction <maximumf>, %79, %cst_43 [1] : vector<56x128xf32> to vector<56xf32>
    %81 = vector.shape_cast %80 : vector<56xf32> to vector<56x1xf32>
    %82 = vector.broadcast %81 : vector<56x1xf32> to vector<56x128xf32>
    %83 = arith.subf %79, %82 : vector<56x128xf32>
    %84 = math.exp %83 : vector<56x128xf32>
    %cst_44 = arith.constant dense<0.000000e+00> : vector<56xf32>
    %85 = vector.multi_reduction <add>, %84, %cst_44 [1] : vector<56x128xf32> to vector<56xf32>
    %86 = vector.shape_cast %85 : vector<56xf32> to vector<56x1xf32>
    %87 = vector.broadcast %86 : vector<56x1xf32> to vector<56x128xf32>
    %88 = arith.divf %84, %87 : vector<56x128xf32>
    %c0_45 = arith.constant 0 : index
    %c1 = arith.constant 1 : index
    %c0_46 = arith.constant 0 : index
    %c0_47 = arith.constant 0 : index
    %89 = vector.load %arg19[%c0_45, %c1, %c0_46, %c0_47] : memref<1x4x56x128xf32, #tpu.memory_space<vmem>>, vector<1x1x56x128xf32>
    %90 = vector.shape_cast %89 : vector<1x1x56x128xf32> to vector<56x128xf32>
    %91 = vector.shape_cast %88 : vector<56x128xf32> to vector<1x1x56x128xf32>
    tpu.vector_store %arg19[%c0_45, %c1, %c0_46, %c0_47], %91 {strides = array<i32>} : memref<1x4x56x128xf32, #tpu.memory_space<vmem>>, vector<1x1x56x128xf32>,
    %92 = vector.extract_strided_slice %53 {offsets = [0, 64], sizes = [56, 32], strides = [1, 1]} : vector<56x128xbf16> to vector<56x32xbf16>
    %93 = vector.extract_strided_slice %57 {offsets = [0, 64], sizes = [128, 32], strides = [1, 1]} : vector<128x128xbf16> to vector<128x32xbf16>
    "tpu.trace_start"() <{level = 10 : i32, message = "qd,kd->qk"}> : () -> ()
    %cst_48 = arith.constant dense<0.000000e+00> : vector<56x128xf32>
    %94 = tpu.matmul %92, %93, %cst_48 {dimension_numbers = #tpu.dot_dimension_numbers<[1], [1], [0], [0], [0, 0, 1, 0], [], []>} : vector<56x32xbf16>, vector<128x32xbf16>, vector<56x128xf32> -> vector<56x128xf32>
    "tpu.trace_stop"() : () -> ()
    %95 = vector.broadcast %6 : vector<1x128xf32> to vector<56x128xf32>
    %96 = arith.addf %94, %95 : vector<56x128xf32>
    %cst_49 = arith.constant dense<0xFF800000> : vector<56xf32>
    %97 = vector.multi_reduction <maximumf>, %96, %cst_49 [1] : vector<56x128xf32> to vector<56xf32>
    %98 = vector.shape_cast %97 : vector<56xf32> to vector<56x1xf32>
    %99 = vector.broadcast %98 : vector<56x1xf32> to vector<56x128xf32>
    %100 = arith.subf %96, %99 : vector<56x128xf32>
    %101 = math.exp %100 : vector<56x128xf32>
    %cst_50 = arith.constant dense<0.000000e+00> : vector<56xf32>
    %102 = vector.multi_reduction <add>, %101, %cst_50 [1] : vector<56x128xf32> to vector<56xf32>
    %103 = vector.shape_cast %102 : vector<56xf32> to vector<56x1xf32>
    %104 = vector.broadcast %103 : vector<56x1xf32> to vector<56x128xf32>
    %105 = arith.divf %101, %104 : vector<56x128xf32>
    %c0_51 = arith.constant 0 : index
    %c2 = arith.constant 2 : index
    %c0_52 = arith.constant 0 : index
    %c0_53 = arith.constant 0 : index
    %106 = vector.load %arg19[%c0_51, %c2, %c0_52, %c0_53] : memref<1x4x56x128xf32, #tpu.memory_space<vmem>>, vector<1x1x56x128xf32>
    %107 = vector.shape_cast %106 : vector<1x1x56x128xf32> to vector<56x128xf32>
    %108 = vector.shape_cast %105 : vector<56x128xf32> to vector<1x1x56x128xf32>
    tpu.vector_store %arg19[%c0_51, %c2, %c0_52, %c0_53], %108 {strides = array<i32>} : memref<1x4x56x128xf32, #tpu.memory_space<vmem>>, vector<1x1x56x128xf32>,
    %109 = vector.extract_strided_slice %53 {offsets = [0, 96], sizes = [56, 32], strides = [1, 1]} : vector<56x128xbf16> to vector<56x32xbf16>
    %110 = vector.extract_strided_slice %57 {offsets = [0, 96], sizes = [128, 32], strides = [1, 1]} : vector<128x128xbf16> to vector<128x32xbf16>
    "tpu.trace_start"() <{level = 10 : i32, message = "qd,kd->qk"}> : () -> ()
    %cst_54 = arith.constant dense<0.000000e+00> : vector<56x128xf32>
    %111 = tpu.matmul %109, %110, %cst_54 {dimension_numbers = #tpu.dot_dimension_numbers<[1], [1], [0], [0], [0, 0, 1, 0], [], []>} : vector<56x32xbf16>, vector<128x32xbf16>, vector<56x128xf32> -> vector<56x128xf32>
    "tpu.trace_stop"() : () -> ()
    %112 = vector.broadcast %6 : vector<1x128xf32> to vector<56x128xf32>
    %113 = arith.addf %111, %112 : vector<56x128xf32>
    %cst_55 = arith.constant dense<0xFF800000> : vector<56xf32>
    %114 = vector.multi_reduction <maximumf>, %113, %cst_55 [1] : vector<56x128xf32> to vector<56xf32>
    %115 = vector.shape_cast %114 : vector<56xf32> to vector<56x1xf32>
    %116 = vector.broadcast %115 : vector<56x1xf32> to vector<56x128xf32>
    %117 = arith.subf %113, %116 : vector<56x128xf32>
    %118 = math.exp %117 : vector<56x128xf32>
    %cst_56 = arith.constant dense<0.000000e+00> : vector<56xf32>
    %119 = vector.multi_reduction <add>, %118, %cst_56 [1] : vector<56x128xf32> to vector<56xf32>
    %120 = vector.shape_cast %119 : vector<56xf32> to vector<56x1xf32>
    %121 = vector.broadcast %120 : vector<56x1xf32> to vector<56x128xf32>
    %122 = arith.divf %118, %121 : vector<56x128xf32>
    %c0_57 = arith.constant 0 : index
    %c3 = arith.constant 3 : index
    %c0_58 = arith.constant 0 : index
    %c0_59 = arith.constant 0 : index
    %123 = vector.load %arg19[%c0_57, %c3, %c0_58, %c0_59] : memref<1x4x56x128xf32, #tpu.memory_space<vmem>>, vector<1x1x56x128xf32>
    %124 = vector.shape_cast %123 : vector<1x1x56x128xf32> to vector<56x128xf32>
    %125 = vector.shape_cast %122 : vector<56x128xf32> to vector<1x1x56x128xf32>
    tpu.vector_store %arg19[%c0_57, %c3, %c0_58, %c0_59], %125 {strides = array<i32>} : memref<1x4x56x128xf32, #tpu.memory_space<vmem>>, vector<1x1x56x128xf32>,
    %126 = arith.truncf %43 : vector<56x128xf32> to vector<56x128xbf16>
    %c0_60 = arith.constant 0 : index
    %c0_61 = arith.constant 0 : index
    %127 = vector.load %arg12[%c0_60, %c0_61] : memref<128x256xbf16, #tpu.memory_space<vmem>>, vector<128x256xbf16>
    %cst_62 = arith.constant dense<0.000000e+00> : vector<56x256xf32>
    %128 = tpu.matmul %126, %127, %cst_62 {dimension_numbers = #tpu.dot_dimension_numbers<[1], [0], [0], [1], [0, 0, 1, 1], [], []>} : vector<56x128xbf16>, vector<128x256xbf16>, vector<56x256xf32> -> vector<56x256xf32>
    %c0_63 = arith.constant 0 : index
    %c0_64 = arith.constant 0 : index
    %129 = vector.load %arg13[%c0_63, %c0_64] : memref<1x256xf32, #tpu.memory_space<vmem>>, vector<1x256xf32>
    %130 = vector.broadcast %129 : vector<1x256xf32> to vector<56x256xf32>
    %131 = arith.addf %128, %130 : vector<56x256xf32>
    %cst_65 = arith.constant 0.000000e+00 : f32
    %132 = vector.broadcast %cst_65 : f32 to vector<56x256xf32>
    %133 = arith.maximumf %131, %132 : vector<56x256xf32>
    %134 = arith.truncf %133 : vector<56x256xf32> to vector<56x256xbf16>
    %c0_66 = arith.constant 0 : index
    %c0_67 = arith.constant 0 : index
    %135 = vector.load %arg14[%c0_66, %c0_67] : memref<256x128xbf16, #tpu.memory_space<vmem>>, vector<256x128xbf16>
    %cst_68 = arith.constant dense<0.000000e+00> : vector<56x128xf32>
    %136 = tpu.matmul %134, %135, %cst_68 {dimension_numbers = #tpu.dot_dimension_numbers<[1], [0], [0], [1], [0, 0, 1, 1], [], []>} : vector<56x256xbf16>, vector<256x128xbf16>, vector<56x128xf32> -> vector<56x128xf32>
    %c0_69 = arith.constant 0 : index
    %c0_70 = arith.constant 0 : index
    %137 = vector.load %arg15[%c0_69, %c0_70] : memref<1x128xf32, #tpu.memory_space<vmem>>, vector<1x128xf32>
    %138 = vector.broadcast %137 : vector<1x128xf32> to vector<56x128xf32>
    %139 = arith.addf %136, %138 : vector<56x128xf32>
    %140 = arith.addf %43, %139 : vector<56x128xf32>
    %cst_71 = arith.constant dense<0.000000e+00> : vector<56xf32>
    %141 = vector.multi_reduction <add>, %140, %cst_71 [1] : vector<56x128xf32> to vector<56xf32>
    %142 = vector.shape_cast %141 : vector<56xf32> to vector<56x1xf32>
    %cst_72 = arith.constant 1.280000e+02 : f32
    %143 = vector.broadcast %cst_72 : f32 to vector<56x1xf32>
    %144 = arith.divf %142, %143 : vector<56x1xf32>
    %145 = vector.broadcast %144 : vector<56x1xf32> to vector<56x128xf32>
    %146 = arith.subf %140, %145 : vector<56x128xf32>
    %147 = arith.mulf %146, %146 : vector<56x128xf32>
    %cst_73 = arith.constant dense<0.000000e+00> : vector<56xf32>
    %148 = vector.multi_reduction <add>, %147, %cst_73 [1] : vector<56x128xf32> to vector<56xf32>
    %149 = vector.shape_cast %148 : vector<56xf32> to vector<56x1xf32>
    %cst_74 = arith.constant 1.280000e+02 : f32
    %150 = vector.broadcast %cst_74 : f32 to vector<56x1xf32>
    %151 = arith.divf %149, %150 : vector<56x1xf32>
    %cst_75 = arith.constant 9.99999974E-6 : f32
    %152 = vector.broadcast %cst_75 : f32 to vector<56x1xf32>
    %153 = arith.addf %151, %152 : vector<56x1xf32>
    %154 = math.rsqrt %153 : vector<56x1xf32>
    %155 = vector.broadcast %154 : vector<56x1xf32> to vector<56x128xf32>
    %156 = arith.mulf %146, %155 : vector<56x128xf32>
    %c0_76 = arith.constant 0 : index
    %c0_77 = arith.constant 0 : index
    %157 = vector.load %arg16[%c0_76, %c0_77] : memref<1x128xf32, #tpu.memory_space<vmem>>, vector<1x128xf32>
    %158 = vector.broadcast %157 : vector<1x128xf32> to vector<56x128xf32>
    %159 = arith.mulf %156, %158 : vector<56x128xf32>
    %c0_78 = arith.constant 0 : index
    %c0_79 = arith.constant 0 : index
    %160 = vector.load %arg17[%c0_78, %c0_79] : memref<1x128xf32, #tpu.memory_space<vmem>>, vector<1x128xf32>
    %161 = vector.broadcast %160 : vector<1x128xf32> to vector<56x128xf32>
    %162 = arith.addf %159, %161 : vector<56x128xf32>
    %c0_80 = arith.constant 0 : index
    %c0_81 = arith.constant 0 : index
    %c0_82 = arith.constant 0 : index
    %163 = vector.load %arg18[%c0_80, %c0_81, %c0_82] : memref<1x56x128xf32, #tpu.memory_space<vmem>>, vector<1x56x128xf32>
    %164 = vector.shape_cast %163 : vector<1x56x128xf32> to vector<56x128xf32>
    %165 = vector.shape_cast %162 : vector<56x128xf32> to vector<1x56x128xf32>
    tpu.vector_store %arg18[%c0_80, %c0_81, %c0_82], %165 {strides = array<i32>} : memref<1x56x128xf32, #tpu.memory_space<vmem>>, vector<1x56x128xf32>,
    return
  }
  func.func @transform_0(%arg0: i32) -> (i32, i32, i32) {
    %c0_i32 = arith.constant 0 : i32
    %c0_i32_0 = arith.constant 0 : i32
    %c0_i32_1 = arith.constant 0 : i32
    return %arg0, %c0_i32, %c0_i32_0 : i32, i32, i32
  }
  func.func @transform_1(%arg0: i32) -> (i32, i32, i32) {
    %c0_i32 = arith.constant 0 : i32
    %c0_i32_0 = arith.constant 0 : i32
    %c0_i32_1 = arith.constant 0 : i32
    %c0_i32_2 = arith.constant 0 : i32
    return %c0_i32, %c0_i32_0, %c0_i32_1 : i32, i32, i32
  }
  func.func @transform_2(%arg0: i32) -> (i32, i32, i32, i32) {
    %c0_i32 = arith.constant 0 : i32
    %c0_i32_0 = arith.constant 0 : i32
    %c0_i32_1 = arith.constant 0 : i32
    %c0_i32_2 = arith.constant 0 : i32
    return %arg0, %c0_i32, %c0_i32_0, %c0_i32_1 : i32, i32, i32, i32
  }
  func.func @transform_3(%arg0: i32) -> (i32, i32) {
    %c0_i32 = arith.constant 0 : i32
    %c0_i32_0 = arith.constant 0 : i32
    %c0_i32_1 = arith.constant 0 : i32
    return %c0_i32, %c0_i32_0 : i32, i32
  }
  func.func @transform_4(%arg0: i32) -> (i32, i32) {
    %c0_i32 = arith.constant 0 : i32
    %c0_i32_0 = arith.constant 0 : i32
    %c0_i32_1 = arith.constant 0 : i32
    return %c0_i32, %c0_i32_0 : i32, i32
  }
  func.func @transform_5(%arg0: i32) -> (i32, i32) {
    %c0_i32 = arith.constant 0 : i32
    %c0_i32_0 = arith.constant 0 : i32
    %c0_i32_1 = arith.constant 0 : i32
    return %c0_i32, %c0_i32_0 : i32, i32
  }
  func.func @transform_6(%arg0: i32) -> (i32, i32) {
    %c0_i32 = arith.constant 0 : i32
    %c0_i32_0 = arith.constant 0 : i32
    %c0_i32_1 = arith.constant 0 : i32
    return %c0_i32, %c0_i32_0 : i32, i32
  }
  func.func @transform_7(%arg0: i32) -> (i32, i32) {
    %c0_i32 = arith.constant 0 : i32
    %c0_i32_0 = arith.constant 0 : i32
    %c0_i32_1 = arith.constant 0 : i32
    return %c0_i32, %c0_i32_0 : i32, i32
  }
  func.func @transform_8(%arg0: i32) -> (i32, i32) {
    %c0_i32 = arith.constant 0 : i32
    %c0_i32_0 = arith.constant 0 : i32
    %c0_i32_1 = arith.constant 0 : i32
    return %c0_i32, %c0_i32_0 : i32, i32
  }
  func.func @transform_9(%arg0: i32) -> (i32, i32) {
    %c0_i32 = arith.constant 0 : i32
    %c0_i32_0 = arith.constant 0 : i32
    %c0_i32_1 = arith.constant 0 : i32
    return %c0_i32, %c0_i32_0 : i32, i32
  }
  func.func @transform_10(%arg0: i32) -> (i32, i32) {
    %c0_i32 = arith.constant 0 : i32
    %c0_i32_0 = arith.constant 0 : i32
    %c0_i32_1 = arith.constant 0 : i32
    return %c0_i32, %c0_i32_0 : i32, i32
  }
  func.func @transform_11(%arg0: i32) -> (i32, i32) {
    %c0_i32 = arith.constant 0 : i32
    %c0_i32_0 = arith.constant 0 : i32
    %c0_i32_1 = arith.constant 0 : i32
    return %c0_i32, %c0_i32_0 : i32, i32
  }
  func.func @transform_12(%arg0: i32) -> (i32, i32) {
    %c0_i32 = arith.constant 0 : i32
    %c0_i32_0 = arith.constant 0 : i32
    %c0_i32_1 = arith.constant 0 : i32
    return %c0_i32, %c0_i32_0 : i32, i32
  }
  func.func @transform_13(%arg0: i32) -> (i32, i32) {
    %c0_i32 = arith.constant 0 : i32
    %c0_i32_0 = arith.constant 0 : i32
    %c0_i32_1 = arith.constant 0 : i32
    return %c0_i32, %c0_i32_0 : i32, i32
  }
  func.func @transform_14(%arg0: i32) -> (i32, i32) {
    %c0_i32 = arith.constant 0 : i32
    %c0_i32_0 = arith.constant 0 : i32
    %c0_i32_1 = arith.constant 0 : i32
    return %c0_i32, %c0_i32_0 : i32, i32
  }
  func.func @transform_15(%arg0: i32) -> (i32, i32) {
    %c0_i32 = arith.constant 0 : i32
    %c0_i32_0 = arith.constant 0 : i32
    %c0_i32_1 = arith.constant 0 : i32
    return %c0_i32, %c0_i32_0 : i32, i32
  }
  func.func @transform_16(%arg0: i32) -> (i32, i32) {
    %c0_i32 = arith.constant 0 : i32
    %c0_i32_0 = arith.constant 0 : i32
    %c0_i32_1 = arith.constant 0 : i32
    return %c0_i32, %c0_i32_0 : i32, i32
  }
  func.func @transform_17(%arg0: i32) -> (i32, i32, i32) {
    %c0_i32 = arith.constant 0 : i32
    %c0_i32_0 = arith.constant 0 : i32
    %c0_i32_1 = arith.constant 0 : i32
    return %arg0, %c0_i32, %c0_i32_0 : i32, i32, i32
  }
  func.func @transform_18(%arg0: i32) -> (i32, i32, i32, i32) {
    %c0_i32 = arith.constant 0 : i32
    %c0_i32_0 = arith.constant 0 : i32
    %c0_i32_1 = arith.constant 0 : i32
    %c0_i32_2 = arith.constant 0 : i32
    return %arg0, %c0_i32, %c0_i32_0, %c0_i32_1 : i32, i32, i32, i32
  }
}

</mosaic_0001>

<llo_original>
// kernel: encoder_1d_forward.1
$region0: #{encoder_1d_forward.1}
  #allocation0 [shape = 'u32[]', space=smem, size = 0x4, offset = 0x4, fixed_abs, tag = 'smem constant byte address 0x4 - core index']
  #allocation1 [shape = 'u32[144,128]{1,0:T(1,128)}', space=vmem, size = 0x12000, scoped, tag = 'internal scratch']
  %s0 = inlined_call_operand.vmem [shape: f32[2,56,128], index: 0, kind: input, shape index: {}]
  %s1 = inlined_call_operand.vmem [shape: f32[1,56,128], index: 1, kind: input, shape index: {}]
  %s2 = inlined_call_operand.vmem [shape: f32[2,1,1,128], index: 2, kind: input, shape index: {}]
  %s3 = inlined_call_operand.vmem [shape: bf16[128,256], index: 3, kind: input, shape index: {}]
  %s4 = inlined_call_operand.vmem [shape: f32[1,256], index: 4, kind: input, shape index: {}]
  %s5 = inlined_call_operand.vmem [shape: bf16[128,256], index: 5, kind: input, shape index: {}]
  %s6 = inlined_call_operand.vmem [shape: f32[1,256], index: 6, kind: input, shape index: {}]
  %s7 = inlined_call_operand.vmem [shape: bf16[256,128], index: 7, kind: input, shape index: {}]
  %s8 = inlined_call_operand.vmem [shape: f32[1,128], index: 8, kind: input, shape index: {}]
  %s9 = inlined_call_operand.vmem [shape: f32[1,128], index: 9, kind: input, shape index: {}]
  %s10 = inlined_call_operand.vmem [shape: f32[1,128], index: 10, kind: input, shape index: {}]
  %s11 = inlined_call_operand.vmem [shape: bf16[128,256], index: 11, kind: input, shape index: {}]
  %s12 = inlined_call_operand.vmem [shape: f32[1,256], index: 12, kind: input, shape index: {}]
  %s13 = inlined_call_operand.vmem [shape: bf16[256,128], index: 13, kind: input, shape index: {}]
  %s14 = inlined_call_operand.vmem [shape: f32[1,128], index: 14, kind: input, shape index: {}]
  %s15 = inlined_call_operand.vmem [shape: f32[1,128], index: 15, kind: input, shape index: {}]
  %s16 = inlined_call_operand.vmem [shape: f32[1,128], index: 16, kind: input, shape index: {}]
  %s17 = inlined_call_operand.vmem [shape: f32[2,56,128], index: 17, kind: output, shape index: {0}]
  %s18 = inlined_call_operand.vmem [shape: f32[2,4,56,128], index: 18, kind: output, shape index: {1}]
  %19 = xla_tuple %s17, %s18
  %s20 = sld [smem:[#allocation0]]
  $region109: #{encoder_1d_forward.1} parent=0
    _
  %s22 = ssub.s32 1, %s20
  %s23 = scalar_select 0, %s22, %s20
  loop: start=0, step=1, limit=4
  $region2: #{encoder_1d_forward.1} parent=0 // loop_pre_header
    _
  $region3: #{encoder_1d_forward.1} parent=0 // loop_header
    %s25 = sphi 0, %s29
    %p26 = scmp.ge.s32.totalorder %s25, 4
    %s35 = sphi 0, %s37
    %s38 = sphi 0, %s35
    %s39 = sphi 0, %s38
    %s55 = sphi 0, %s39
    %s59 = sphi 0, %s59
    %s61 = sphi 0, %s59
    %s62 = sphi 0, %s61
    %s76 = sphi 0, %s62
    %s82 = sphi 0, %s84
    %s85 = sphi 0, %s82
    %s86 = sphi 0, %s85
    %s102 = sphi 0, %s86
    %s106 = sphi 0, %s106
    %s108 = sphi 0, %s106
    %s109 = sphi 0, %s108
    %s123 = sphi 0, %s109
    %s127 = sphi 0, %s127
    %s129 = sphi 0, %s127
    %s130 = sphi 0, %s129
    %s144 = sphi 0, %s130
    %s148 = sphi 0, %s148
    %s150 = sphi 0, %s148
    %s151 = sphi 0, %s150
    %s165 = sphi 0, %s151
    %s169 = sphi 0, %s169
    %s171 = sphi 0, %s169
    %s172 = sphi 0, %s171
    %s186 = sphi 0, %s172
    %s190 = sphi 0, %s190
    %s192 = sphi 0, %s190
    %s193 = sphi 0, %s192
    %s207 = sphi 0, %s193
    %s211 = sphi 0, %s211
    %s213 = sphi 0, %s211
    %s214 = sphi 0, %s213
    %s228 = sphi 0, %s214
    %s232 = sphi 0, %s232
    %s234 = sphi 0, %s232
    %s235 = sphi 0, %s234
    %s249 = sphi 0, %s235
    %s253 = sphi 0, %s253
    %s255 = sphi 0, %s253
    %s256 = sphi 0, %s255
    %s270 = sphi 0, %s256
    %s274 = sphi 0, %s274
    %s276 = sphi 0, %s274
    %s277 = sphi 0, %s276
    %s291 = sphi 0, %s277
    %s295 = sphi 0, %s295
    %s297 = sphi 0, %s295
    %s298 = sphi 0, %s297
    %s312 = sphi 0, %s298
    %s316 = sphi 0, %s316
    %s318 = sphi 0, %s316
    %s319 = sphi 0, %s318
    %s333 = sphi 0, %s319
    %s337 = sphi 0, %s337
    %s339 = sphi 0, %s337
    %s340 = sphi 0, %s339
    %s354 = sphi 0, %s340
    %s358 = sphi 0, %s358
    %s360 = sphi 0, %s358
    %s361 = sphi 0, %s360
    %s375 = sphi 0, %s361
    %s379 = sphi 0, %s379
    %s381 = sphi 0, %s379
    %s382 = sphi 0, %s381
    %s396 = sphi 0, %s382
    %s402 = sphi 0, %s404
    %s405 = sphi 0, %s402
    %s406 = sphi 0, %s405
    %s422 = sphi 0, %s406
    %s428 = sphi 0, %s430
    %s431 = sphi 0, %s428
    %s432 = sphi 0, %s431
    %s448 = sphi 0, %s432
  $region4: #{encoder_1d_forward.1} parent=0 // loop_header_branch
    %28 = sbr.rel (%p26) target = $region8
  $region5: #{encoder_1d_forward.1} parent=0 // loop_body
    %s30 = ssub.s32 %s25, 1
    %s31 = ssub.s32 %s25, 2
    %s32 = sadd.s32 %s25, 1
    %s33 = ssub.s32 %s25, %s32
    %p34 = scmp.eq.s32.totalorder %s33, 0
    %s36 = sadd.s32 %s35, 1
    %s37 = scalar_select %p34, %s35, %s36
    %p40 = pneg %p34
    %p41 = scmp.eq.s32.totalorder %s25, 1
    %p42 = por %p40, %p41
    %p43 = scmp.ne.s32.totalorder %s35, %s38
    %p44 = scmp.eq.s32.totalorder %s25, 0
    %p45 = por %p43, %p44
    %p46 = scmp.ne.s32.totalorder %s35, %s38
    %p47 = scmp.eq.s32.totalorder %s30, 1
    %p48 = por %p46, %p47
    %p49 = scmp.ne.s32.totalorder %s38, %s39
    %p50 = scmp.eq.s32.totalorder %s30, 0
    %p51 = por %p49, %p50
    %p52 = scmp.ne.s32.totalorder %s38, %s39
    %p53 = scmp.eq.s32.totalorder %s31, 1
    %p54 = por %p52, %p53
    %p56 = scmp.ne.s32.totalorder %s39, %s55
    %p57 = scmp.eq.s32.totalorder %s31, 0
    %p58 = por %p56, %p57
    %s60 = sadd.s32 %s59, 1
    %p63 = scmp.eq.s32.totalorder %s25, 1
    %p64 = scmp.ne.s32.totalorder %s59, %s61
    %p65 = scmp.eq.s32.totalorder %s25, 0
    %p66 = por %p64, %p65
    %p67 = scmp.ne.s32.totalorder %s59, %s61
    %p68 = scmp.eq.s32.totalorder %s30, 1
    %p69 = por %p67, %p68
    %p70 = scmp.ne.s32.totalorder %s61, %s62
    %p71 = scmp.eq.s32.totalorder %s30, 0
    %p72 = por %p70, %p71
    %p73 = scmp.ne.s32.totalorder %s61, %s62
    %p74 = scmp.eq.s32.totalorder %s31, 1
    %p75 = por %p73, %p74
    %p77 = scmp.ne.s32.totalorder %s62, %s76
    %p78 = scmp.eq.s32.totalorder %s31, 0
    %p79 = por %p77, %p78
    %s80 = ssub.s32 %s25, %s32
    %p81 = scmp.eq.s32.totalorder %s80, 0
    %s83 = sadd.s32 %s82, 1
    %s84 = scalar_select %p81, %s82, %s83
    %p87 = pneg %p81
    %p88 = scmp.eq.s32.totalorder %s25, 1
    %p89 = por %p87, %p88
    %p90 = scmp.ne.s32.totalorder %s82, %s85
    %p91 = scmp.eq.s32.totalorder %s25, 0
    %p92 = por %p90, %p91
    %p93 = scmp.ne.s32.totalorder %s82, %s85
    %p94 = scmp.eq.s32.totalorder %s30, 1
    %p95 = por %p93, %p94
    %p96 = scmp.ne.s32.totalorder %s85, %s86
    %p97 = scmp.eq.s32.totalorder %s30, 0
    %p98 = por %p96, %p97
    %p99 = scmp.ne.s32.totalorder %s85, %s86
    %p100 = scmp.eq.s32.totalorder %s31, 1
    %p101 = por %p99, %p100
    %p103 = scmp.ne.s32.totalorder %s86, %s102
    %p104 = scmp.eq.s32.totalorder %s31, 0
    %p105 = por %p103, %p104
    %s107 = sadd.s32 %s106, 1
    %p110 = scmp.eq.s32.totalorder %s25, 1
    %p111 = scmp.ne.s32.totalorder %s106, %s108
    %p112 = scmp.eq.s32.totalorder %s25, 0
    %p113 = por %p111, %p112
    %p114 = scmp.ne.s32.totalorder %s106, %s108
    %p115 = scmp.eq.s32.totalorder %s30, 1
    %p116 = por %p114, %p115
    %p117 = scmp.ne.s32.totalorder %s108, %s109
    %p118 = scmp.eq.s32.totalorder %s30, 0
    %p119 = por %p117, %p118
    %p120 = scmp.ne.s32.totalorder %s108, %s109
    %p121 = scmp.eq.s32.totalorder %s31, 1
    %p122 = por %p120, %p121
    %p124 = scmp.ne.s32.totalorder %s109, %s123
    %p125 = scmp.eq.s32.totalorder %s31, 0
    %p126 = por %p124, %p125
    %s128 = sadd.s32 %s127, 1
    %p131 = scmp.eq.s32.totalorder %s25, 1
    %p132 = scmp.ne.s32.totalorder %s127, %s129
    %p133 = scmp.eq.s32.totalorder %s25, 0
    %p134 = por %p132, %p133
    %p135 = scmp.ne.s32.totalorder %s127, %s129
    %p136 = scmp.eq.s32.totalorder %s30, 1
    %p137 = por %p135, %p136
    %p138 = scmp.ne.s32.totalorder %s129, %s130
    %p139 = scmp.eq.s32.totalorder %s30, 0
    %p140 = por %p138, %p139
    %p141 = scmp.ne.s32.totalorder %s129, %s130
    %p142 = scmp.eq.s32.totalorder %s31, 1
    %p143 = por %p141, %p142
    %p145 = scmp.ne.s32.totalorder %s130, %s144
    %p146 = scmp.eq.s32.totalorder %s31, 0
    %p147 = por %p145, %p146
    %s149 = sadd.s32 %s148, 1
    %p152 = scmp.eq.s32.totalorder %s25, 1
    %p153 = scmp.ne.s32.totalorder %s148, %s150
    %p154 = scmp.eq.s32.totalorder %s25, 0
    %p155 = por %p153, %p154
    %p156 = scmp.ne.s32.totalorder %s148, %s150
    %p157 = scmp.eq.s32.totalorder %s30, 1
    %p158 = por %p156, %p157
    %p159 = scmp.ne.s32.totalorder %s150, %s151
    %p160 = scmp.eq.s32.totalorder %s30, 0
    %p161 = por %p159, %p160
    %p162 = scmp.ne.s32.totalorder %s150, %s151
    %p163 = scmp.eq.s32.totalorder %s31, 1
    %p164 = por %p162, %p163
    %p166 = scmp.ne.s32.totalorder %s151, %s165
    %p167 = scmp.eq.s32.totalorder %s31, 0
    %p168 = por %p166, %p167
    %s170 = sadd.s32 %s169, 1
    %p173 = scmp.eq.s32.totalorder %s25, 1
    %p174 = scmp.ne.s32.totalorder %s169, %s171
    %p175 = scmp.eq.s32.totalorder %s25, 0
    %p176 = por %p174, %p175
    %p177 = scmp.ne.s32.totalorder %s169, %s171
    %p178 = scmp.eq.s32.totalorder %s30, 1
    %p179 = por %p177, %p178
    %p180 = scmp.ne.s32.totalorder %s171, %s172
    %p181 = scmp.eq.s32.totalorder %s30, 0
    %p182 = por %p180, %p181
    %p183 = scmp.ne.s32.totalorder %s171, %s172
    %p184 = scmp.eq.s32.totalorder %s31, 1
    %p185 = por %p183, %p184
    %p187 = scmp.ne.s32.totalorder %s172, %s186
    %p188 = scmp.eq.s32.totalorder %s31, 0
    %p189 = por %p187, %p188
    %s191 = sadd.s32 %s190, 1
    %p194 = scmp.eq.s32.totalorder %s25, 1
    %p195 = scmp.ne.s32.totalorder %s190, %s192
    %p196 = scmp.eq.s32.totalorder %s25, 0
    %p197 = por %p195, %p196
    %p198 = scmp.ne.s32.totalorder %s190, %s192
    %p199 = scmp.eq.s32.totalorder %s30, 1
    %p200 = por %p198, %p199
    %p201 = scmp.ne.s32.totalorder %s192, %s193
    %p202 = scmp.eq.s32.totalorder %s30, 0
    %p203 = por %p201, %p202
    %p204 = scmp.ne.s32.totalorder %s192, %s193
    %p205 = scmp.eq.s32.totalorder %s31, 1
    %p206 = por %p204, %p205
    %p208 = scmp.ne.s32.totalorder %s193, %s207
    %p209 = scmp.eq.s32.totalorder %s31, 0
    %p210 = por %p208, %p209
    %s212 = sadd.s32 %s211, 1
    %p215 = scmp.eq.s32.totalorder %s25, 1
    %p216 = scmp.ne.s32.totalorder %s211, %s213
    %p217 = scmp.eq.s32.totalorder %s25, 0
    %p218 = por %p216, %p217
    %p219 = scmp.ne.s32.totalorder %s211, %s213
    %p220 = scmp.eq.s32.totalorder %s30, 1
    %p221 = por %p219, %p220
    %p222 = scmp.ne.s32.totalorder %s213, %s214
    %p223 = scmp.eq.s32.totalorder %s30, 0
    %p224 = por %p222, %p223
    %p225 = scmp.ne.s32.totalorder %s213, %s214
    %p226 = scmp.eq.s32.totalorder %s31, 1
    %p227 = por %p225, %p226
    %p229 = scmp.ne.s32.totalorder %s214, %s228
    %p230 = scmp.eq.s32.totalorder %s31, 0
    %p231 = por %p229, %p230
    %s233 = sadd.s32 %s232, 1
    %p236 = scmp.eq.s32.totalorder %s25, 1
    %p237 = scmp.ne.s32.totalorder %s232, %s234
    %p238 = scmp.eq.s32.totalorder %s25, 0
    %p239 = por %p237, %p238
    %p240 = scmp.ne.s32.totalorder %s232, %s234
    %p241 = scmp.eq.s32.totalorder %s30, 1
    %p242 = por %p240, %p241
    %p243 = scmp.ne.s32.totalorder %s234, %s235
    %p244 = scmp.eq.s32.totalorder %s30, 0
    %p245 = por %p243, %p244
    %p246 = scmp.ne.s32.totalorder %s234, %s235
    %p247 = scmp.eq.s32.totalorder %s31, 1
    %p248 = por %p246, %p247
    %p250 = scmp.ne.s32.totalorder %s235, %s249
    %p251 = scmp.eq.s32.totalorder %s31, 0
    %p252 = por %p250, %p251
    %s254 = sadd.s32 %s253, 1
    %p257 = scmp.eq.s32.totalorder %s25, 1
    %p258 = scmp.ne.s32.totalorder %s253, %s255
    %p259 = scmp.eq.s32.totalorder %s25, 0
    %p260 = por %p258, %p259
    %p261 = scmp.ne.s32.totalorder %s253, %s255
    %p262 = scmp.eq.s32.totalorder %s30, 1
    %p263 = por %p261, %p262
    %p264 = scmp.ne.s32.totalorder %s255, %s256
    %p265 = scmp.eq.s32.totalorder %s30, 0
    %p266 = por %p264, %p265
    %p267 = scmp.ne.s32.totalorder %s255, %s256
    %p268 = scmp.eq.s32.totalorder %s31, 1
    %p269 = por %p267, %p268
    %p271 = scmp.ne.s32.totalorder %s256, %s270
    %p272 = scmp.eq.s32.totalorder %s31, 0
    %p273 = por %p271, %p272
    %s275 = sadd.s32 %s274, 1
    %p278 = scmp.eq.s32.totalorder %s25, 1
    %p279 = scmp.ne.s32.totalorder %s274, %s276
    %p280 = scmp.eq.s32.totalorder %s25, 0
    %p281 = por %p279, %p280
    %p282 = scmp.ne.s32.totalorder %s274, %s276
    %p283 = scmp.eq.s32.totalorder %s30, 1
    %p284 = por %p282, %p283
    %p285 = scmp.ne.s32.totalorder %s276, %s277
    %p286 = scmp.eq.s32.totalorder %s30, 0
    %p287 = por %p285, %p286
    %p288 = scmp.ne.s32.totalorder %s276, %s277
    %p289 = scmp.eq.s32.totalorder %s31, 1
    %p290 = por %p288, %p289
    %p292 = scmp.ne.s32.totalorder %s277, %s291
    %p293 = scmp.eq.s32.totalorder %s31, 0
    %p294 = por %p292, %p293
    %s296 = sadd.s32 %s295, 1
    %p299 = scmp.eq.s32.totalorder %s25, 1
    %p300 = scmp.ne.s32.totalorder %s295, %s297
    %p301 = scmp.eq.s32.totalorder %s25, 0
    %p302 = por %p300, %p301
    %p303 = scmp.ne.s32.totalorder %s295, %s297
    %p304 = scmp.eq.s32.totalorder %s30, 1
    %p305 = por %p303, %p304
    %p306 = scmp.ne.s32.totalorder %s297, %s298
    %p307 = scmp.eq.s32.totalorder %s30, 0
    %p308 = por %p306, %p307
    %p309 = scmp.ne.s32.totalorder %s297, %s298
    %p310 = scmp.eq.s32.totalorder %s31, 1
    %p311 = por %p309, %p310
    %p313 = scmp.ne.s32.totalorder %s298, %s312
    %p314 = scmp.eq.s32.totalorder %s31, 0
    %p315 = por %p313, %p314
    %s317 = sadd.s32 %s316, 1
    %p320 = scmp.eq.s32.totalorder %s25, 1
    %p321 = scmp.ne.s32.totalorder %s316, %s318
    %p322 = scmp.eq.s32.totalorder %s25, 0
    %p323 = por %p321, %p322
    %p324 = scmp.ne.s32.totalorder %s316, %s318
    %p325 = scmp.eq.s32.totalorder %s30, 1
    %p326 = por %p324, %p325
    %p327 = scmp.ne.s32.totalorder %s318, %s319
    %p328 = scmp.eq.s32.totalorder %s30, 0
    %p329 = por %p327, %p328
    %p330 = scmp.ne.s32.totalorder %s318, %s319
    %p331 = scmp.eq.s32.totalorder %s31, 1
    %p332 = por %p330, %p331
    %p334 = scmp.ne.s32.totalorder %s319, %s333
    %p335 = scmp.eq.s32.totalorder %s31, 0
    %p336 = por %p334, %p335
    %s338 = sadd.s32 %s337, 1
    %p341 = scmp.eq.s32.totalorder %s25, 1
    %p342 = scmp.ne.s32.totalorder %s337, %s339
    %p343 = scmp.eq.s32.totalorder %s25, 0
    %p344 = por %p342, %p343
    %p345 = scmp.ne.s32.totalorder %s337, %s339
    %p346 = scmp.eq.s32.totalorder %s30, 1
    %p347 = por %p345, %p346
    %p348 = scmp.ne.s32.totalorder %s339, %s340
    %p349 = scmp.eq.s32.totalorder %s30, 0
    %p350 = por %p348, %p349
    %p351 = scmp.ne.s32.totalorder %s339, %s340
    %p352 = scmp.eq.s32.totalorder %s31, 1
    %p353 = por %p351, %p352
    %p355 = scmp.ne.s32.totalorder %s340, %s354
    %p356 = scmp.eq.s32.totalorder %s31, 0
    %p357 = por %p355, %p356
    %s359 = sadd.s32 %s358, 1
    %p362 = scmp.eq.s32.totalorder %s25, 1
    %p363 = scmp.ne.s32.totalorder %s358, %s360
    %p364 = scmp.eq.s32.totalorder %s25, 0
    %p365 = por %p363, %p364
    %p366 = scmp.ne.s32.totalorder %s358, %s360
    %p367 = scmp.eq.s32.totalorder %s30, 1
    %p368 = por %p366, %p367
    %p369 = scmp.ne.s32.totalorder %s360, %s361
    %p370 = scmp.eq.s32.totalorder %s30, 0
    %p371 = por %p369, %p370
    %p372 = scmp.ne.s32.totalorder %s360, %s361
    %p373 = scmp.eq.s32.totalorder %s31, 1
    %p374 = por %p372, %p373
    %p376 = scmp.ne.s32.totalorder %s361, %s375
    %p377 = scmp.eq.s32.totalorder %s31, 0
    %p378 = por %p376, %p377
    %s380 = sadd.s32 %s379, 1
    %p383 = scmp.eq.s32.totalorder %s25, 1
    %p384 = scmp.ne.s32.totalorder %s379, %s381
    %p385 = scmp.eq.s32.totalorder %s25, 0
    %p386 = por %p384, %p385
    %p387 = scmp.ne.s32.totalorder %s379, %s381
    %p388 = scmp.eq.s32.totalorder %s30, 1
    %p389 = por %p387, %p388
    %p390 = scmp.ne.s32.totalorder %s381, %s382
    %p391 = scmp.eq.s32.totalorder %s30, 0
    %p392 = por %p390, %p391
    %p393 = scmp.ne.s32.totalorder %s381, %s382
    %p394 = scmp.eq.s32.totalorder %s31, 1
    %p395 = por %p393, %p394
    %p397 = scmp.ne.s32.totalorder %s382, %s396
    %p398 = scmp.eq.s32.totalorder %s31, 0
    %p399 = por %p397, %p398
    %s400 = ssub.s32 %s25, %s32
    %p401 = scmp.eq.s32.totalorder %s400, 0
    %s403 = sadd.s32 %s402, 1
    %s404 = scalar_select %p401, %s402, %s403
    %p407 = pneg %p401
    %p408 = scmp.eq.s32.totalorder %s25, 1
    %p409 = por %p407, %p408
    %p410 = scmp.ne.s32.totalorder %s402, %s405
    %p411 = scmp.eq.s32.totalorder %s25, 0
    %p412 = por %p410, %p411
    %p413 = scmp.ne.s32.totalorder %s402, %s405
    %p414 = scmp.eq.s32.totalorder %s30, 1
    %p415 = por %p413, %p414
    %p416 = scmp.ne.s32.totalorder %s405, %s406
    %p417 = scmp.eq.s32.totalorder %s30, 0
    %p418 = por %p416, %p417
    %p419 = scmp.ne.s32.totalorder %s405, %s406
    %p420 = scmp.eq.s32.totalorder %s31, 1
    %p421 = por %p419, %p420
    %p423 = scmp.ne.s32.totalorder %s406, %s422
    %p424 = scmp.eq.s32.totalorder %s31, 0
    %p425 = por %p423, %p424
    %s426 = ssub.s32 %s25, %s32
    %p427 = scmp.eq.s32.totalorder %s426, 0
    %s429 = sadd.s32 %s428, 1
    %s430 = scalar_select %p427, %s428, %s429
    %p433 = pneg %p427
    %p434 = scmp.eq.s32.totalorder %s25, 1
    %p435 = por %p433, %p434
    %p436 = scmp.ne.s32.totalorder %s428, %s431
    %p437 = scmp.eq.s32.totalorder %s25, 0
    %p438 = por %p436, %p437
    %p439 = scmp.ne.s32.totalorder %s428, %s431
    %p440 = scmp.eq.s32.totalorder %s30, 1
    %p441 = por %p439, %p440
    %p442 = scmp.ne.s32.totalorder %s431, %s432
    %p443 = scmp.eq.s32.totalorder %s30, 0
    %p444 = por %p442, %p443
    %p445 = scmp.ne.s32.totalorder %s431, %s432
    %p446 = scmp.eq.s32.totalorder %s31, 1
    %p447 = por %p445, %p446
    %p449 = scmp.ne.s32.totalorder %s432, %s448
    %p450 = scmp.eq.s32.totalorder %s31, 0
    %p451 = por %p449, %p450
    %p452 = scmp.le.s32.totalorder 1, %s25
    %p453 = scmp.lt.s32.totalorder %s25, 3
    %p454 = pnand %p452, %p453
    %p455 = pneg %p454
    // Predicated region
    $region9: #{encoder_1d_forward.1} parent=5 // pred_check
      _
    $region10: #{encoder_1d_forward.1} parent=5 // pred_check_branch
      %457 = sbr.rel (%p454) target = $region12
    $region11: #{encoder_1d_forward.1} parent=5 // pred_region
      %s458 = ssub.s32 %s25, 1
      // Predicated region
      $region13: #{encoder_1d_forward.1} parent=11 // pred_check
        %p459 = pneg %p72
      $region14: #{encoder_1d_forward.1} parent=11 // pred_check_branch
        %461 = sbr.rel (%p459) target = $region16
      $region15: #{encoder_1d_forward.1} parent=11 // pred_region
        _
      $region16: #{encoder_1d_forward.1} parent=11 // pred_fallthru
        _
      // Predicated region
      $region17: #{encoder_1d_forward.1} parent=11 // pred_check
        %p462 = pneg %p119
      $region18: #{encoder_1d_forward.1} parent=11 // pred_check_branch
        %464 = sbr.rel (%p462) target = $region20
      $region19: #{encoder_1d_forward.1} parent=11 // pred_region
        _
      $region20: #{encoder_1d_forward.1} parent=11 // pred_fallthru
        _
      // Predicated region
      $region21: #{encoder_1d_forward.1} parent=11 // pred_check
        %p465 = pneg %p140
      $region22: #{encoder_1d_forward.1} parent=11 // pred_check_branch
        %467 = sbr.rel (%p465) target = $region24
      $region23: #{encoder_1d_forward.1} parent=11 // pred_region
        _
      $region24: #{encoder_1d_forward.1} parent=11 // pred_fallthru
        _
      // Predicated region
      $region25: #{encoder_1d_forward.1} parent=11 // pred_check
        %p468 = pneg %p161
      $region26: #{encoder_1d_forward.1} parent=11 // pred_check_branch
        %470 = sbr.rel (%p468) target = $region28
      $region27: #{encoder_1d_forward.1} parent=11 // pred_region
        _
      $region28: #{encoder_1d_forward.1} parent=11 // pred_fallthru
        _
      // Predicated region
      $region29: #{encoder_1d_forward.1} parent=11 // pred_check
        %p471 = pneg %p182
      $region30: #{encoder_1d_forward.1} parent=11 // pred_check_branch
        %473 = sbr.rel (%p471) target = $region32
      $region31: #{encoder_1d_forward.1} parent=11 // pred_region
        _
      $region32: #{encoder_1d_forward.1} parent=11 // pred_fallthru
        _
      // Predicated region
      $region33: #{encoder_1d_forward.1} parent=11 // pred_check
        %p474 = pneg %p203
      $region34: #{encoder_1d_forward.1} parent=11 // pred_check_branch
        %476 = sbr.rel (%p474) target = $region36
      $region35: #{encoder_1d_forward.1} parent=11 // pred_region
        _
      $region36: #{encoder_1d_forward.1} parent=11 // pred_fallthru
        _
      // Predicated region
      $region37: #{encoder_1d_forward.1} parent=11 // pred_check
        %p477 = pneg %p224
      $region38: #{encoder_1d_forward.1} parent=11 // pred_check_branch
        %479 = sbr.rel (%p477) target = $region40
      $region39: #{encoder_1d_forward.1} parent=11 // pred_region
        _
      $region40: #{encoder_1d_forward.1} parent=11 // pred_fallthru
        _
      // Predicated region
      $region41: #{encoder_1d_forward.1} parent=11 // pred_check
        %p480 = pneg %p245
      $region42: #{encoder_1d_forward.1} parent=11 // pred_check_branch
        %482 = sbr.rel (%p480) target = $region44
      $region43: #{encoder_1d_forward.1} parent=11 // pred_region
        _
      $region44: #{encoder_1d_forward.1} parent=11 // pred_fallthru
        _
      // Predicated region
      $region45: #{encoder_1d_forward.1} parent=11 // pred_check
        %p483 = pneg %p266
      $region46: #{encoder_1d_forward.1} parent=11 // pred_check_branch
        %485 = sbr.rel (%p483) target = $region48
      $region47: #{encoder_1d_forward.1} parent=11 // pred_region
        _
      $region48: #{encoder_1d_forward.1} parent=11 // pred_fallthru
        _
      // Predicated region
      $region49: #{encoder_1d_forward.1} parent=11 // pred_check
        %p486 = pneg %p287
      $region50: #{encoder_1d_forward.1} parent=11 // pred_check_branch
        %488 = sbr.rel (%p486) target = $region52
      $region51: #{encoder_1d_forward.1} parent=11 // pred_region
        _
      $region52: #{encoder_1d_forward.1} parent=11 // pred_fallthru
        _
      // Predicated region
      $region53: #{encoder_1d_forward.1} parent=11 // pred_check
        %p489 = pneg %p308
      $region54: #{encoder_1d_forward.1} parent=11 // pred_check_branch
        %491 = sbr.rel (%p489) target = $region56
      $region55: #{encoder_1d_forward.1} parent=11 // pred_region
        _
      $region56: #{encoder_1d_forward.1} parent=11 // pred_fallthru
        _
      // Predicated region
      $region57: #{encoder_1d_forward.1} parent=11 // pred_check
        %p492 = pneg %p329
      $region58: #{encoder_1d_forward.1} parent=11 // pred_check_branch
        %494 = sbr.rel (%p492) target = $region60
      $region59: #{encoder_1d_forward.1} parent=11 // pred_region
        _
      $region60: #{encoder_1d_forward.1} parent=11 // pred_fallthru
        _
      // Predicated region
      $region61: #{encoder_1d_forward.1} parent=11 // pred_check
        %p495 = pneg %p350
      $region62: #{encoder_1d_forward.1} parent=11 // pred_check_branch
        %497 = sbr.rel (%p495) target = $region64
      $region63: #{encoder_1d_forward.1} parent=11 // pred_region
        _
      $region64: #{encoder_1d_forward.1} parent=11 // pred_fallthru
        _
      // Predicated region
      $region65: #{encoder_1d_forward.1} parent=11 // pred_check
        %p498 = pneg %p371
      $region66: #{encoder_1d_forward.1} parent=11 // pred_check_branch
        %500 = sbr.rel (%p498) target = $region68
      $region67: #{encoder_1d_forward.1} parent=11 // pred_region
        _
      $region68: #{encoder_1d_forward.1} parent=11 // pred_fallthru
        _
      // Predicated region
      $region69: #{encoder_1d_forward.1} parent=11 // pred_check
        %p501 = pneg %p392
      $region70: #{encoder_1d_forward.1} parent=11 // pred_check_branch
        %503 = sbr.rel (%p501) target = $region72
      $region71: #{encoder_1d_forward.1} parent=11 // pred_region
        _
      $region72: #{encoder_1d_forward.1} parent=11 // pred_fallthru
        _
    $region12: #{encoder_1d_forward.1} parent=5 // pred_fallthru
      _
    %p504 = scmp.lt.s32.totalorder %s25, 2
    // Predicated region
    $region73: #{encoder_1d_forward.1} parent=5 // pred_check
      %p505 = pneg %p504
    $region74: #{encoder_1d_forward.1} parent=5 // pred_check_branch
      %507 = sbr.rel (%p505) target = $region76
    $region75: #{encoder_1d_forward.1} parent=5 // pred_region
      // Predicated region
      $region77: #{encoder_1d_forward.1} parent=75 // pred_check
        %p508 = pneg %p45
      $region78: #{encoder_1d_forward.1} parent=75 // pred_check_branch
        %510 = sbr.rel (%p508) target = $region80
      $region79: #{encoder_1d_forward.1} parent=75 // pred_region
        %p511 = scmp.lt.s32.totalorder %s25, 1
        %s512 = scalar_select %p511, %s25, 1
        %s513 = smul.addr %s512, 7
        %s514 = smul.addr %s513, 8
        %s515 = scalar_lea.vmem %s0, %s514
      $region80: #{encoder_1d_forward.1} parent=75 // pred_fallthru
        _
      // Predicated region
      $region81: #{encoder_1d_forward.1} parent=75 // pred_check
        %p516 = pneg %p92
      $region82: #{encoder_1d_forward.1} parent=75 // pred_check_branch
        %518 = sbr.rel (%p516) target = $region84
      $region83: #{encoder_1d_forward.1} parent=75 // pred_region
        %p519 = scmp.lt.s32.totalorder %s25, 1
        %s520 = scalar_select %p519, %s25, 1
        %s521 = scalar_lea.vmem %s2, %s520
      $region84: #{encoder_1d_forward.1} parent=75 // pred_fallthru
        _
    $region76: #{encoder_1d_forward.1} parent=5 // pred_fallthru
      _
    %p522 = scmp.le.s32.totalorder 1, %s25
    %p523 = scmp.lt.s32.totalorder %s25, 3
    %p524 = pnand %p522, %p523
    %p525 = pneg %p524
    // Predicated region
    $region85: #{encoder_1d_forward.1} parent=5 // pred_check
      _
    $region86: #{encoder_1d_forward.1} parent=5 // pred_check_branch
      %527 = sbr.rel (%p524) target = $region88
    $region87: #{encoder_1d_forward.1} parent=5 // pred_region
      %s528 = ssub.s32 %s25, 1
      %p529 = scmp.lt.s32.totalorder %s30, 1
      %s530 = scalar_select %p529, %s30, 1
      %s531 = smul.addr %s530, 7
      %s532 = smul.addr %s531, 8
      %s533 = scalar_lea.vmem %s0, %s532
      %p534 = pneg %p51
      %p535 = pneg %p48
      %p536 = pneg %p72
      %p537 = pneg %p69
      %p538 = scmp.lt.s32.totalorder %s30, 1
      %s539 = scalar_select %p538, %s30, 1
      %s540 = scalar_lea.vmem %s2, %s539
      %p541 = pneg %p98
      %p542 = pneg %p95
      %p543 = pneg %p119
      %p544 = pneg %p116
      %p545 = pneg %p140
      %p546 = pneg %p137
      %p547 = pneg %p161
      %p548 = pneg %p158
      %p549 = pneg %p182
      %p550 = pneg %p179
      %p551 = pneg %p203
      %p552 = pneg %p200
      %p553 = pneg %p224
      %p554 = pneg %p221
      %p555 = pneg %p245
      %p556 = pneg %p242
      %p557 = pneg %p266
      %p558 = pneg %p263
      %p559 = pneg %p287
      %p560 = pneg %p284
      %p561 = pneg %p308
      %p562 = pneg %p305
      %p563 = pneg %p329
      %p564 = pneg %p326
      %p565 = pneg %p350
      %p566 = pneg %p347
      %p567 = pneg %p371
      %p568 = pneg %p368
      %p569 = pneg %p392
      %p570 = pneg %p389
      %p571 = pneg %p418
      %p572 = pneg %p415
      %p573 = scmp.lt.s32.totalorder %s30, 1
      %s574 = scalar_select %p573, %s30, 1
      %s575 = smul.addr %s574, 7
      %s576 = smul.addr %s575, 8
      %s577 = scalar_lea.vmem %s17, %s576
      %p578 = pneg %p444
      %p579 = pneg %p441
      %p580 = scmp.lt.s32.totalorder %s30, 1
      %s581 = scalar_select %p580, %s30, 1
      %s582 = smul.addr %s581, 28
      %s583 = smul.addr %s582, 8
      %s584 = scalar_lea.vmem %s18, %s583
      %p585 = scmp.lt.s32.totalorder %s30, 1
      %s586 = scalar_select %p585, %s30, 1
      %s587 = smul.addr %s586, 7
      %s588 = smul.addr %s587, 8
      %s589 = scalar_lea.vmem %s0, %s588
      %p590 = scmp.lt.s32.totalorder %s30, 1
      %s591 = scalar_select %p590, %s30, 1
      %s592 = scalar_lea.vmem %s2, %s591
      %p593 = scmp.lt.s32.totalorder %s30, 1
      %s594 = scalar_select %p593, %s30, 1
      %s595 = smul.addr %s594, 7
      %s596 = smul.addr %s595, 8
      %s597 = scalar_lea.vmem %s17, %s596
      %p598 = scmp.lt.s32.totalorder %s30, 1
      %s599 = scalar_select %p598, %s30, 1
      %s600 = smul.addr %s599, 28
      %s601 = smul.addr %s600, 8
      %s602 = scalar_lea.vmem %s18, %s601
      %v604 = vld [vmem:[%s589] sm:$0xff]
      %v605 = vld [vmem:[%s589 + $0x8] sm:$0xff]
      %v606 = vld [vmem:[%s589 + $0x10] sm:$0xff]
      %v607 = vld [vmem:[%s589 + $0x18] sm:$0xff]
      %v608 = vld [vmem:[%s589 + $0x20] sm:$0xff]
      %v609 = vld [vmem:[%s589 + $0x28] sm:$0xff]
      %v610 = vld [vmem:[%s589 + $0x30] sm:$0xff]
      %v611 = vld [vmem:[%s1] sm:$0xff]
      %v612 = vld [vmem:[%s1 + $0x8] sm:$0xff]
      %v613 = vld [vmem:[%s1 + $0x10] sm:$0xff]
      %v614 = vld [vmem:[%s1 + $0x18] sm:$0xff]
      %v615 = vld [vmem:[%s1 + $0x20] sm:$0xff]
      %v616 = vld [vmem:[%s1 + $0x28] sm:$0xff]
      %v617 = vld [vmem:[%s1 + $0x30] sm:$0xff]
      %v618 = vadd.f32 %v604, %v611
      %v619 = vadd.f32 %v605, %v612
      %v620 = vadd.f32 %v606, %v613
      %v621 = vadd.f32 %v607, %v614
      %v622 = vadd.f32 %v608, %v615
      %v623 = vadd.f32 %v609, %v616
      %v624 = vadd.f32 %v610, %v617
      %v625 = vld [vmem:[%s592] sm:$0x1]
      %v626 = vpack.c.bf16 %v619, %v618
      %v627 = vpack.c.bf16 %v621, %v620
      %v628 = vpack.c.bf16 %v623, %v622
      %v629 = vpack.c.bf16 %v624, %v624
      %v630 = vld [vmem:[%s5] sm:$0xff]
      %v631 = vld [vmem:[%s5 + $0x8] sm:$0xff]
      %v632 = vld [vmem:[%s5 + $0x10] sm:$0xff]
      %v633 = vld [vmem:[%s5 + $0x18] sm:$0xff]
      %v634 = vld [vmem:[%s5 + $0x20] sm:$0xff]
      %v635 = vld [vmem:[%s5 + $0x28] sm:$0xff]
      %v636 = vld [vmem:[%s5 + $0x30] sm:$0xff]
      %v637 = vld [vmem:[%s5 + $0x38] sm:$0xff]
      %v638 = vld [vmem:[%s5 + $0x40] sm:$0xff]
      %v639 = vld [vmem:[%s5 + $0x48] sm:$0xff]
      %v640 = vld [vmem:[%s5 + $0x50] sm:$0xff]
      %v641 = vld [vmem:[%s5 + $0x58] sm:$0xff]
      %v642 = vld [vmem:[%s5 + $0x60] sm:$0xff]
      %v643 = vld [vmem:[%s5 + $0x68] sm:$0xff]
      %v644 = vld [vmem:[%s5 + $0x70] sm:$0xff]
      %v645 = vld [vmem:[%s5 + $0x78] sm:$0xff]
      %v646 = vld [vmem:[%s6] sm:$0x3]
      %v648 = vlaneseq
      %v649 = vshrl.u32 %v648, 7
      %v650 = vsub.s32 0, %v649
      %v651 = vrot.slane %v646, %v650
      %v652 = vlaneseq
      %v653 = vshrl.u32 %v652, 7
      %v654 = vsub.s32 1, %v653
      %v655 = vrot.slane %v646, %v654
      %v674 = vunpack.c.l.b16 %v630
      %v675 = vunpack.c.h.b16 %v630
      %v676 = vunpack.c.l.b16 %v631
      %v677 = vunpack.c.h.b16 %v631
      %v678 = vunpack.c.l.b16 %v632
      %v679 = vunpack.c.h.b16 %v632
      %v680 = vunpack.c.l.b16 %v633
      %v681 = vunpack.c.h.b16 %v633
      %v682 = vunpack.c.l.b16 %v634
      %v683 = vunpack.c.h.b16 %v634
      %v684 = vunpack.c.l.b16 %v635
      %v685 = vunpack.c.h.b16 %v635
      %v686 = vunpack.c.l.b16 %v636
      %v687 = vunpack.c.h.b16 %v636
      %v688 = vunpack.c.l.b16 %v637
      %v689 = vunpack.c.h.b16 %v637
      %v690 = vunpack.c.l.b16 %v638
      %v691 = vunpack.c.h.b16 %v638
      %v692 = vunpack.c.l.b16 %v639
      %v693 = vunpack.c.h.b16 %v639
      %v694 = vunpack.c.l.b16 %v640
      %v695 = vunpack.c.h.b16 %v640
      %v696 = vunpack.c.l.b16 %v641
      %v697 = vunpack.c.h.b16 %v641
      %v698 = vunpack.c.l.b16 %v642
      %v699 = vunpack.c.h.b16 %v642
      %v700 = vunpack.c.l.b16 %v643
      %v701 = vunpack.c.h.b16 %v643
      %v702 = vunpack.c.l.b16 %v644
      %v703 = vunpack.c.h.b16 %v644
      %v704 = vunpack.c.l.b16 %v645
      %v705 = vunpack.c.h.b16 %v645
      %v706 = vpack.c.b16 %v676, %v674
      %v707 = vpack.c.b16 %v677, %v675
      %v708 = vpack.c.b16 %v680, %v678
      %v709 = vpack.c.b16 %v681, %v679
      %v710 = vpack.c.b16 %v684, %v682
      %v711 = vpack.c.b16 %v685, %v683
      %v712 = vpack.c.b16 %v688, %v686
      %v713 = vpack.c.b16 %v689, %v687
      %v714 = vpack.c.b16 %v692, %v690
      %v715 = vpack.c.b16 %v693, %v691
      %v716 = vpack.c.b16 %v696, %v694
      %v717 = vpack.c.b16 %v697, %v695
      %v718 = vpack.c.b16 %v700, %v698
      %v719 = vpack.c.b16 %v701, %v699
      %v720 = vpack.c.b16 %v704, %v702
      %v721 = vpack.c.b16 %v705, %v703
      %738 = vmatprep.subr.bf16.mxu0 %v707
      %739 = vmatpush1.bf16.msra.mxu0 %v706
      %740 = vmatprep.subr.bf16.mxu0 %v709
      %741 = vmatpush1.bf16.msra.mxu0 %v708
      %742 = vmatprep.subr.bf16.mxu0 %v711
      %743 = vmatpush1.bf16.msra.mxu0 %v710
      %744 = vmatprep.subr.bf16.mxu0 %v713
      %745 = vmatpush1.bf16.msra.mxu0 %v712
      %746 = vmatprep.subr.bf16.mxu0 %v715
      %747 = vmatpush1.bf16.msra.mxu0 %v714
      %748 = vmatprep.subr.bf16.mxu0 %v717
      %749 = vmatpush1.bf16.msra.mxu0 %v716
      %750 = vmatprep.subr.bf16.mxu0 %v719
      %751 = vmatpush1.bf16.msra.mxu0 %v718
      %752 = vmatprep.subr.bf16.mxu0 %v721
      %753 = vmatpush1.bf16.msra.mxu0 %v720
      %754 = vmatprep.subr.bf16.mxu0 0
      %755 = vmatpush1.bf16.msra.mxu0 0
      %756 = vmatprep.subr.bf16.mxu0 0
      %757 = vmatpush1.bf16.msra.mxu0 0
      %758 = vmatprep.subr.bf16.mxu0 0
      %759 = vmatpush1.bf16.msra.mxu0 0
      %760 = vmatprep.subr.bf16.mxu0 0
      %761 = vmatpush1.bf16.msra.mxu0 0
      %762 = vmatprep.subr.bf16.mxu0 0
      %763 = vmatpush1.bf16.msra.mxu0 0
      %764 = vmatprep.subr.bf16.mxu0 0
      %765 = vmatpush1.bf16.msra.mxu0 0
      %766 = vmatprep.subr.bf16.mxu0 0
      %767 = vmatpush1.bf16.msra.mxu0 0
      %768 = vmatprep.subr.bf16.mxu0 0
      %769 = vmatpush1.bf16.msra.mxu0 0
      %770 = vmatprep.mubr.bf16.mxu0 0
      %771 = vmatmul.mubr.bf16.gmra.mrb[0].mxu0 %v626
      %v772 = vpop.f32.mrb[0].mxu0
      %v773 = vadd.f32 %v651, %v772
      %v774 = vpop.f32.mrb[0].mxu0
      %v775 = vadd.f32 %v655, %v774
      %v776 = vpop.f32.mrb[0].mxu0
      %v777 = vadd.f32 %v651, %v776
      %v778 = vpop.f32.mrb[0].mxu0
      %v779 = vadd.f32 %v655, %v778
      %780 = vmatprep.mubr.bf16.mxu0 0
      %781 = vmatmul.mubr.bf16.gmra.mrb[0].mxu0 %v627
      %v782 = vpop.f32.mrb[0].mxu0
      %v783 = vadd.f32 %v651, %v782
      %v784 = vpop.f32.mrb[0].mxu0
      %v785 = vadd.f32 %v655, %v784
      %v786 = vpop.f32.mrb[0].mxu0
      %v787 = vadd.f32 %v651, %v786
      %v788 = vpop.f32.mrb[0].mxu0
      %v789 = vadd.f32 %v655, %v788
      %790 = vmatprep.mubr.bf16.mxu0 0
      %791 = vmatmul.mubr.bf16.gmra.mrb[0].mxu0 %v628
      %v792 = vpop.f32.mrb[0].mxu0
      %v793 = vadd.f32 %v651, %v792
      %v794 = vpop.f32.mrb[0].mxu0
      %v795 = vadd.f32 %v655, %v794
      %v796 = vpop.f32.mrb[0].mxu0
      %v797 = vadd.f32 %v651, %v796
      %v798 = vpop.f32.mrb[0].mxu0
      %v799 = vadd.f32 %v655, %v798
      %800 = vmatprep.mubr.bf16.mxu0 0
      %801 = vmatmul.mubr.bf16.gmra.mrb[0].mxu0 %v629
      %v802 = vpop.f32.mrb[0].mxu0
      %v803 = vadd.f32 %v651, %v802
      %v804 = vpop.f32.mrb[0].mxu0
      %v805 = vadd.f32 %v655, %v804
      %v806 = vpop.f32.mrb[0].mxu0
      %v807 = vpop.f32.mrb[0].mxu0
      %808 = vdwg.mxu0
      %v809 = vmax.f32 %v773, 0.0
      %v810 = vmax.f32 %v775, 0.0
      %v811 = vmax.f32 %v777, 0.0
      %v812 = vmax.f32 %v779, 0.0
      %v813 = vmax.f32 %v783, 0.0
      %v814 = vmax.f32 %v785, 0.0
      %v815 = vmax.f32 %v787, 0.0
      %v816 = vmax.f32 %v789, 0.0
      %v817 = vmax.f32 %v793, 0.0
      %v818 = vmax.f32 %v795, 0.0
      %v819 = vmax.f32 %v797, 0.0
      %v820 = vmax.f32 %v799, 0.0
      %v821 = vmax.f32 %v803, 0.0
      %v822 = vmax.f32 %v805, 0.0
      %v823 = vpack.c.bf16 %v811, %v809
      %v824 = vpack.c.bf16 %v812, %v810
      %v825 = vpack.c.bf16 %v815, %v813
      %v826 = vpack.c.bf16 %v816, %v814
      %v827 = vpack.c.bf16 %v819, %v817
      %v828 = vpack.c.bf16 %v820, %v818
      %v829 = vpack.c.bf16 %v821, %v821
      %v830 = vpack.c.bf16 %v822, %v822
      %v831 = vld [vmem:[%s7] sm:$0xf]
      %v832 = vld [vmem:[%s7 + $0x4] sm:$0xf]
      %v833 = vld [vmem:[%s7 + $0x8] sm:$0xf]
      %v834 = vld [vmem:[%s7 + $0xc] sm:$0xf]
      %v835 = vld [vmem:[%s7 + $0x10] sm:$0xf]
      %v836 = vld [vmem:[%s7 + $0x14] sm:$0xf]
      %v837 = vld [vmem:[%s7 + $0x18] sm:$0xf]
      %v838 = vld [vmem:[%s7 + $0x1c] sm:$0xf]
      %v839 = vld [vmem:[%s7 + $0x20] sm:$0xf]
      %v840 = vld [vmem:[%s7 + $0x24] sm:$0xf]
      %v841 = vld [vmem:[%s7 + $0x28] sm:$0xf]
      %v842 = vld [vmem:[%s7 + $0x2c] sm:$0xf]
      %v843 = vld [vmem:[%s7 + $0x30] sm:$0xf]
      %v844 = vld [vmem:[%s7 + $0x34] sm:$0xf]
      %v845 = vld [vmem:[%s7 + $0x38] sm:$0xf]
      %v846 = vld [vmem:[%s7 + $0x3c] sm:$0xf]
      %v847 = vld [vmem:[%s7 + $0x40] sm:$0xf]
      %v848 = vld [vmem:[%s7 + $0x44] sm:$0xf]
      %v849 = vld [vmem:[%s7 + $0x48] sm:$0xf]
      %v850 = vld [vmem:[%s7 + $0x4c] sm:$0xf]
      %v851 = vld [vmem:[%s7 + $0x50] sm:$0xf]
      %v852 = vld [vmem:[%s7 + $0x54] sm:$0xf]
      %v853 = vld [vmem:[%s7 + $0x58] sm:$0xf]
      %v854 = vld [vmem:[%s7 + $0x5c] sm:$0xf]
      %v855 = vld [vmem:[%s7 + $0x60] sm:$0xf]
      %v856 = vld [vmem:[%s7 + $0x64] sm:$0xf]
      %v857 = vld [vmem:[%s7 + $0x68] sm:$0xf]
      %v858 = vld [vmem:[%s7 + $0x6c] sm:$0xf]
      %v859 = vld [vmem:[%s7 + $0x70] sm:$0xf]
      %v860 = vld [vmem:[%s7 + $0x74] sm:$0xf]
      %v861 = vld [vmem:[%s7 + $0x78] sm:$0xf]
      %v862 = vld [vmem:[%s7 + $0x7c] sm:$0xf]
      %v863 = vld [vmem:[%s8] sm:$0x1]
      %v865 = vlaneseq
      %v866 = vshrl.u32 %v865, 7
      %v867 = vsub.s32 0, %v866
      %v868 = vrot.slane %v863, %v867
      %v902 = vunpack.c.l.b16 %v831
      %v903 = vunpack.c.l.b16 %v832
      %v904 = vunpack.c.l.b16 %v833
      %v905 = vunpack.c.l.b16 %v834
      %v906 = vunpack.c.l.b16 %v835
      %v907 = vunpack.c.l.b16 %v836
      %v908 = vunpack.c.l.b16 %v837
      %v909 = vunpack.c.l.b16 %v838
      %v910 = vunpack.c.l.b16 %v839
      %v911 = vunpack.c.l.b16 %v840
      %v912 = vunpack.c.l.b16 %v841
      %v913 = vunpack.c.l.b16 %v842
      %v914 = vunpack.c.l.b16 %v843
      %v915 = vunpack.c.l.b16 %v844
      %v916 = vunpack.c.l.b16 %v845
      %v917 = vunpack.c.l.b16 %v846
      %v918 = vunpack.c.l.b16 %v847
      %v919 = vunpack.c.l.b16 %v848
      %v920 = vunpack.c.l.b16 %v849
      %v921 = vunpack.c.l.b16 %v850
      %v922 = vunpack.c.l.b16 %v851
      %v923 = vunpack.c.l.b16 %v852
      %v924 = vunpack.c.l.b16 %v853
      %v925 = vunpack.c.l.b16 %v854
      %v926 = vunpack.c.l.b16 %v855
      %v927 = vunpack.c.l.b16 %v856
      %v928 = vunpack.c.l.b16 %v857
      %v929 = vunpack.c.l.b16 %v858
      %v930 = vunpack.c.l.b16 %v859
      %v931 = vunpack.c.l.b16 %v860
      %v932 = vunpack.c.l.b16 %v861
      %v933 = vunpack.c.l.b16 %v862
      %v934 = vpack.c.b16 %v903, %v902
      %v935 = vpack.c.b16 %v905, %v904
      %v936 = vpack.c.b16 %v907, %v906
      %v937 = vpack.c.b16 %v909, %v908
      %v938 = vpack.c.b16 %v911, %v910
      %v939 = vpack.c.b16 %v913, %v912
      %v940 = vpack.c.b16 %v915, %v914
      %v941 = vpack.c.b16 %v917, %v916
      %v942 = vpack.c.b16 %v919, %v918
      %v943 = vpack.c.b16 %v921, %v920
      %v944 = vpack.c.b16 %v923, %v922
      %v945 = vpack.c.b16 %v925, %v924
      %v946 = vpack.c.b16 %v927, %v926
      %v947 = vpack.c.b16 %v929, %v928
      %v948 = vpack.c.b16 %v931, %v930
      %v949 = vpack.c.b16 %v933, %v932
      %966 = vmatprep.subr.bf16.mxu0 0
      %967 = vmatpush1.bf16.msra.mxu0 %v934
      %968 = vmatprep.subr.bf16.mxu0 0
      %969 = vmatpush1.bf16.msra.mxu0 %v935
      %970 = vmatprep.subr.bf16.mxu0 0
      %971 = vmatpush1.bf16.msra.mxu0 %v936
      %972 = vmatprep.subr.bf16.mxu0 0
      %973 = vmatpush1.bf16.msra.mxu0 %v937
      %974 = vmatprep.subr.bf16.mxu0 0
      %975 = vmatpush1.bf16.msra.mxu0 %v938
      %976 = vmatprep.subr.bf16.mxu0 0
      %977 = vmatpush1.bf16.msra.mxu0 %v939
      %978 = vmatprep.subr.bf16.mxu0 0
      %979 = vmatpush1.bf16.msra.mxu0 %v940
      %980 = vmatprep.subr.bf16.mxu0 0
      %981 = vmatpush1.bf16.msra.mxu0 %v941
      %982 = vmatprep.subr.bf16.mxu0 0
      %983 = vmatpush1.bf16.msra.mxu0 %v942
      %984 = vmatprep.subr.bf16.mxu0 0
      %985 = vmatpush1.bf16.msra.mxu0 %v943
      %986 = vmatprep.subr.bf16.mxu0 0
      %987 = vmatpush1.bf16.msra.mxu0 %v944
      %988 = vmatprep.subr.bf16.mxu0 0
      %989 = vmatpush1.bf16.msra.mxu0 %v945
      %990 = vmatprep.subr.bf16.mxu0 0
      %991 = vmatpush1.bf16.msra.mxu0 %v946
      %992 = vmatprep.subr.bf16.mxu0 0
      %993 = vmatpush1.bf16.msra.mxu0 %v947
      %994 = vmatprep.subr.bf16.mxu0 0
      %995 = vmatpush1.bf16.msra.mxu0 %v948
      %996 = vmatprep.subr.bf16.mxu0 0
      %997 = vmatpush1.bf16.msra.mxu0 %v949
      %998 = vmatprep.mubr.bf16.mxu0 %v824
      %999 = vmatmul.mubr.bf16.gmra.mrb[0].mxu0 %v823
      %v1000 = vpop.f32.mrb[0].mxu0
      %v1001 = vadd.f32 %v868, %v1000
      %v1002 = vpop.f32.mrb[0].mxu0
      %v1003 = vpop.f32.mrb[0].mxu0
      %v1004 = vadd.f32 %v868, %v1003
      %v1005 = vpop.f32.mrb[0].mxu0
      %1006 = vmatprep.mubr.bf16.mxu0 %v826
      %1007 = vmatmul.mubr.bf16.gmra.mrb[0].mxu0 %v825
      %v1008 = vpop.f32.mrb[0].mxu0
      %v1009 = vadd.f32 %v868, %v1008
      %v1010 = vpop.f32.mrb[0].mxu0
      %v1011 = vpop.f32.mrb[0].mxu0
      %v1012 = vadd.f32 %v868, %v1011
      %v1013 = vpop.f32.mrb[0].mxu0
      %1014 = vmatprep.mubr.bf16.mxu0 %v828
      %1015 = vmatmul.mubr.bf16.gmra.mrb[0].mxu0 %v827
      %v1016 = vpop.f32.mrb[0].mxu0
      %v1017 = vadd.f32 %v868, %v1016
      %v1018 = vpop.f32.mrb[0].mxu0
      %v1019 = vpop.f32.mrb[0].mxu0
      %v1020 = vadd.f32 %v868, %v1019
      %v1021 = vpop.f32.mrb[0].mxu0
      %1022 = vmatprep.mubr.bf16.mxu0 %v830
      %1023 = vmatmul.mubr.bf16.gmra.mrb[0].mxu0 %v829
      %v1024 = vpop.f32.mrb[0].mxu0
      %v1025 = vadd.f32 %v868, %v1024
      %v1026 = vpop.f32.mrb[0].mxu0
      %v1027 = vpop.f32.mrb[0].mxu0
      %v1028 = vpop.f32.mrb[0].mxu0
      %1029 = vdwg.mxu0
      %v1030 = vadd.f32 %v618, %v1001
      %v1031 = vadd.f32 %v619, %v1004
      %v1032 = vadd.f32 %v620, %v1009
      %v1033 = vadd.f32 %v621, %v1012
      %v1034 = vadd.f32 %v622, %v1017
      %v1035 = vadd.f32 %v623, %v1020
      %v1036 = vadd.f32 %v624, %v1025
      %1037 = vadd.xlane.f32.xlu0 %v1030
      %v1038 = vpop.xlane.xlu0 %1037
      %1039 = vadd.xlane.f32.xlu0 %v1031
      %v1040 = vpop.xlane.xlu0 %1039
      %1041 = vadd.xlane.f32.xlu0 %v1032
      %v1042 = vpop.xlane.xlu0 %1041
      %1043 = vadd.xlane.f32.xlu0 %v1033
      %v1044 = vpop.xlane.xlu0 %1043
      %1045 = vadd.xlane.f32.xlu0 %v1034
      %v1046 = vpop.xlane.xlu0 %1045
      %1047 = vadd.xlane.f32.xlu0 %v1035
      %v1048 = vpop.xlane.xlu0 %1047
      %1049 = vadd.xlane.f32.xlu0 %v1036
      %v1050 = vpop.xlane.xlu0 %1049
      %v1051 = vrcp.pop 128.0
      %v1052 = vmul.f32 %v1038, %v1051
      %v1053 = vmul.f32 %v1040, %v1051
      %v1054 = vmul.f32 %v1042, %v1051
      %v1055 = vmul.f32 %v1044, %v1051
      %v1056 = vmul.f32 %v1046, %v1051
      %v1057 = vmul.f32 %v1048, %v1051
      %v1058 = vmul.f32 %v1050, %v1051
      %v1059 = vsub.f32 %v1030, %v1052
      %v1060 = vsub.f32 %v1031, %v1053
      %v1061 = vsub.f32 %v1032, %v1054
      %v1062 = vsub.f32 %v1033, %v1055
      %v1063 = vsub.f32 %v1034, %v1056
      %v1064 = vsub.f32 %v1035, %v1057
      %v1065 = vsub.f32 %v1036, %v1058
      %v1066 = vmul.f32 %v1059, %v1059
      %v1067 = vmul.f32 %v1060, %v1060
      %v1068 = vmul.f32 %v1061, %v1061
      %v1069 = vmul.f32 %v1062, %v1062
      %v1070 = vmul.f32 %v1063, %v1063
      %v1071 = vmul.f32 %v1064, %v1064
      %v1072 = vmul.f32 %v1065, %v1065
      %1073 = vadd.xlane.f32.xlu0 %v1066
      %v1074 = vpop.xlane.xlu0 %1073
      %1075 = vadd.xlane.f32.xlu0 %v1067
      %v1076 = vpop.xlane.xlu0 %1075
      %1077 = vadd.xlane.f32.xlu0 %v1068
      %v1078 = vpop.xlane.xlu0 %1077
      %1079 = vadd.xlane.f32.xlu0 %v1069
      %v1080 = vpop.xlane.xlu0 %1079
      %1081 = vadd.xlane.f32.xlu0 %v1070
      %v1082 = vpop.xlane.xlu0 %1081
      %1083 = vadd.xlane.f32.xlu0 %v1071
      %v1084 = vpop.xlane.xlu0 %1083
      %1085 = vadd.xlane.f32.xlu0 %v1072
      %v1086 = vpop.xlane.xlu0 %1085
      %v1087 = vmul.f32 %v1074, %v1051
      %v1088 = vmul.f32 %v1076, %v1051
      %v1089 = vmul.f32 %v1078, %v1051
      %v1090 = vmul.f32 %v1080, %v1051
      %v1091 = vmul.f32 %v1082, %v1051
      %v1092 = vmul.f32 %v1084, %v1051
      %v1093 = vmul.f32 %v1086, %v1051
      %v1094 = vadd.f32 %v1087, 1e-05
      %v1095 = vadd.f32 %v1088, 1e-05
      %v1096 = vadd.f32 %v1089, 1e-05
      %v1097 = vadd.f32 %v1090, 1e-05
      %v1098 = vadd.f32 %v1091, 1e-05
      %v1099 = vadd.f32 %v1092, 1e-05
      %v1100 = vadd.f32 %v1093, 1e-05
      %v1101 = vrsqrt.pop %v1094
      %v1102 = vrsqrt.pop %v1095
      %v1103 = vrsqrt.pop %v1096
      %v1104 = vrsqrt.pop %v1097
      %v1105 = vrsqrt.pop %v1098
      %v1106 = vrsqrt.pop %v1099
      %v1107 = vrsqrt.pop %v1100
      %v1108 = vmul.f32 %v1059, %v1101
      %v1109 = vmul.f32 %v1060, %v1102
      %v1110 = vmul.f32 %v1061, %v1103
      %v1111 = vmul.f32 %v1062, %v1104
      %v1112 = vmul.f32 %v1063, %v1105
      %v1113 = vmul.f32 %v1064, %v1106
      %v1114 = vmul.f32 %v1065, %v1107
      %v1115 = vld [vmem:[%s9] sm:$0x1]
      %v1117 = vlaneseq
      %v1118 = vshrl.u32 %v1117, 7
      %v1119 = vsub.s32 0, %v1118
      %v1120 = vrot.slane %v1115, %v1119
      %v1122 = vmul.f32 %v1108, %v1120
      %v1123 = vmul.f32 %v1109, %v1120
      %v1124 = vmul.f32 %v1110, %v1120
      %v1125 = vmul.f32 %v1111, %v1120
      %v1126 = vmul.f32 %v1112, %v1120
      %v1127 = vmul.f32 %v1113, %v1120
      %v1128 = vmul.f32 %v1114, %v1120
      %v1129 = vld [vmem:[%s10] sm:$0x1]
      %v1131 = vlaneseq
      %v1132 = vshrl.u32 %v1131, 7
      %v1133 = vsub.s32 0, %v1132
      %v1134 = vrot.slane %v1129, %v1133
      %v1136 = vadd.f32 %v1122, %v1134
      %v1137 = vadd.f32 %v1123, %v1134
      %v1138 = vadd.f32 %v1124, %v1134
      %v1139 = vadd.f32 %v1125, %v1134
      %v1140 = vadd.f32 %v1126, %v1134
      %v1141 = vadd.f32 %v1127, %v1134
      %v1142 = vadd.f32 %v1128, %v1134
      %v1143 = vpack.c.bf16 %v1137, %v1136
      %v1144 = vpack.c.bf16 %v1139, %v1138
      %v1145 = vpack.c.bf16 %v1141, %v1140
      %v1146 = vpack.c.bf16 %v1142, %v1142
      %v1147 = vld [vmem:[%s3] sm:$0xff]
      %v1148 = vld [vmem:[%s3 + $0x8] sm:$0xff]
      %v1149 = vld [vmem:[%s3 + $0x10] sm:$0xff]
      %v1150 = vld [vmem:[%s3 + $0x18] sm:$0xff]
      %v1151 = vld [vmem:[%s3 + $0x20] sm:$0xff]
      %v1152 = vld [vmem:[%s3 + $0x28] sm:$0xff]
      %v1153 = vld [vmem:[%s3 + $0x30] sm:$0xff]
      %v1154 = vld [vmem:[%s3 + $0x38] sm:$0xff]
      %v1155 = vld [vmem:[%s3 + $0x40] sm:$0xff]
      %v1156 = vld [vmem:[%s3 + $0x48] sm:$0xff]
      %v1157 = vld [vmem:[%s3 + $0x50] sm:$0xff]
      %v1158 = vld [vmem:[%s3 + $0x58] sm:$0xff]
      %v1159 = vld [vmem:[%s3 + $0x60] sm:$0xff]
      %v1160 = vld [vmem:[%s3 + $0x68] sm:$0xff]
      %v1161 = vld [vmem:[%s3 + $0x70] sm:$0xff]
      %v1162 = vld [vmem:[%s3 + $0x78] sm:$0xff]
      %v1163 = vld [vmem:[%s4] sm:$0x3]
      %v1165 = vlaneseq
      %v1166 = vshrl.u32 %v1165, 7
      %v1167 = vsub.s32 0, %v1166
      %v1168 = vrot.slane %v1163, %v1167
      %v1169 = vlaneseq
      %v1170 = vshrl.u32 %v1169, 7
      %v1171 = vsub.s32 1, %v1170
      %v1172 = vrot.slane %v1163, %v1171
      %v1191 = vunpack.c.l.b16 %v1147
      %v1192 = vunpack.c.h.b16 %v1147
      %v1193 = vunpack.c.l.b16 %v1148
      %v1194 = vunpack.c.h.b16 %v1148
      %v1195 = vunpack.c.l.b16 %v1149
      %v1196 = vunpack.c.h.b16 %v1149
      %v1197 = vunpack.c.l.b16 %v1150
      %v1198 = vunpack.c.h.b16 %v1150
      %v1199 = vunpack.c.l.b16 %v1151
      %v1200 = vunpack.c.h.b16 %v1151
      %v1201 = vunpack.c.l.b16 %v1152
      %v1202 = vunpack.c.h.b16 %v1152
      %v1203 = vunpack.c.l.b16 %v1153
      %v1204 = vunpack.c.h.b16 %v1153
      %v1205 = vunpack.c.l.b16 %v1154
      %v1206 = vunpack.c.h.b16 %v1154
      %v1207 = vunpack.c.l.b16 %v1155
      %v1208 = vunpack.c.h.b16 %v1155
      %v1209 = vunpack.c.l.b16 %v1156
      %v1210 = vunpack.c.h.b16 %v1156
      %v1211 = vunpack.c.l.b16 %v1157
      %v1212 = vunpack.c.h.b16 %v1157
      %v1213 = vunpack.c.l.b16 %v1158
      %v1214 = vunpack.c.h.b16 %v1158
      %v1215 = vunpack.c.l.b16 %v1159
      %v1216 = vunpack.c.h.b16 %v1159
      %v1217 = vunpack.c.l.b16 %v1160
      %v1218 = vunpack.c.h.b16 %v1160
      %v1219 = vunpack.c.l.b16 %v1161
      %v1220 = vunpack.c.h.b16 %v1161
      %v1221 = vunpack.c.l.b16 %v1162
      %v1222 = vunpack.c.h.b16 %v1162
      %v1223 = vpack.c.b16 %v1193, %v1191
      %v1224 = vpack.c.b16 %v1194, %v1192
      %v1225 = vpack.c.b16 %v1197, %v1195
      %v1226 = vpack.c.b16 %v1198, %v1196
      %v1227 = vpack.c.b16 %v1201, %v1199
      %v1228 = vpack.c.b16 %v1202, %v1200
      %v1229 = vpack.c.b16 %v1205, %v1203
      %v1230 = vpack.c.b16 %v1206, %v1204
      %v1231 = vpack.c.b16 %v1209, %v1207
      %v1232 = vpack.c.b16 %v1210, %v1208
      %v1233 = vpack.c.b16 %v1213, %v1211
      %v1234 = vpack.c.b16 %v1214, %v1212
      %v1235 = vpack.c.b16 %v1217, %v1215
      %v1236 = vpack.c.b16 %v1218, %v1216
      %v1237 = vpack.c.b16 %v1221, %v1219
      %v1238 = vpack.c.b16 %v1222, %v1220
      %1255 = vmatprep.subr.bf16.mxu0 %v1224
      %1256 = vmatpush1.bf16.msra.mxu0 %v1223
      %1257 = vmatprep.subr.bf16.mxu0 %v1226
      %1258 = vmatpush1.bf16.msra.mxu0 %v1225
      %1259 = vmatprep.subr.bf16.mxu0 %v1228
      %1260 = vmatpush1.bf16.msra.mxu0 %v1227
      %1261 = vmatprep.subr.bf16.mxu0 %v1230
      %1262 = vmatpush1.bf16.msra.mxu0 %v1229
      %1263 = vmatprep.subr.bf16.mxu0 %v1232
      %1264 = vmatpush1.bf16.msra.mxu0 %v1231
      %1265 = vmatprep.subr.bf16.mxu0 %v1234
      %1266 = vmatpush1.bf16.msra.mxu0 %v1233
      %1267 = vmatprep.subr.bf16.mxu0 %v1236
      %1268 = vmatpush1.bf16.msra.mxu0 %v1235
      %1269 = vmatprep.subr.bf16.mxu0 %v1238
      %1270 = vmatpush1.bf16.msra.mxu0 %v1237
      %1271 = vmatprep.subr.bf16.mxu0 0
      %1272 = vmatpush1.bf16.msra.mxu0 0
      %1273 = vmatprep.subr.bf16.mxu0 0
      %1274 = vmatpush1.bf16.msra.mxu0 0
      %1275 = vmatprep.subr.bf16.mxu0 0
      %1276 = vmatpush1.bf16.msra.mxu0 0
      %1277 = vmatprep.subr.bf16.mxu0 0
      %1278 = vmatpush1.bf16.msra.mxu0 0
      %1279 = vmatprep.subr.bf16.mxu0 0
      %1280 = vmatpush1.bf16.msra.mxu0 0
      %1281 = vmatprep.subr.bf16.mxu0 0
      %1282 = vmatpush1.bf16.msra.mxu0 0
      %1283 = vmatprep.subr.bf16.mxu0 0
      %1284 = vmatpush1.bf16.msra.mxu0 0
      %1285 = vmatprep.subr.bf16.mxu0 0
      %1286 = vmatpush1.bf16.msra.mxu0 0
      %1287 = vmatprep.mubr.bf16.mxu0 0
      %1288 = vmatmul.mubr.bf16.gmra.mrb[0].mxu0 %v1143
      %v1289 = vpop.f32.mrb[0].mxu0
      %v1290 = vadd.f32 %v1168, %v1289
      %v1291 = vpop.f32.mrb[0].mxu0
      %v1292 = vadd.f32 %v1172, %v1291
      %v1293 = vpop.f32.mrb[0].mxu0
      %v1294 = vadd.f32 %v1168, %v1293
      %v1295 = vpop.f32.mrb[0].mxu0
      %v1296 = vadd.f32 %v1172, %v1295
      %1297 = vmatprep.mubr.bf16.mxu0 0
      %1298 = vmatmul.mubr.bf16.gmra.mrb[0].mxu0 %v1144
      %v1299 = vpop.f32.mrb[0].mxu0
      %v1300 = vadd.f32 %v1168, %v1299
      %v1301 = vpop.f32.mrb[0].mxu0
      %v1302 = vadd.f32 %v1172, %v1301
      %v1303 = vpop.f32.mrb[0].mxu0
      %v1304 = vadd.f32 %v1168, %v1303
      %v1305 = vpop.f32.mrb[0].mxu0
      %v1306 = vadd.f32 %v1172, %v1305
      %1307 = vmatprep.mubr.bf16.mxu0 0
      %1308 = vmatmul.mubr.bf16.gmra.mrb[0].mxu0 %v1145
      %v1309 = vpop.f32.mrb[0].mxu0
      %v1310 = vadd.f32 %v1168, %v1309
      %v1311 = vpop.f32.mrb[0].mxu0
      %v1312 = vadd.f32 %v1172, %v1311
      %v1313 = vpop.f32.mrb[0].mxu0
      %v1314 = vadd.f32 %v1168, %v1313
      %v1315 = vpop.f32.mrb[0].mxu0
      %v1316 = vadd.f32 %v1172, %v1315
      %1317 = vmatprep.mubr.bf16.mxu0 0
      %1318 = vmatmul.mubr.bf16.gmra.mrb[0].mxu0 %v1146
      %v1319 = vpop.f32.mrb[0].mxu0
      %v1320 = vadd.f32 %v1168, %v1319
      %v1321 = vpop.f32.mrb[0].mxu0
      %v1322 = vadd.f32 %v1172, %v1321
      %v1323 = vpop.f32.mrb[0].mxu0
      %v1324 = vpop.f32.mrb[0].mxu0
      %1325 = vdwg.mxu0
      %v1326 = vmul.f32 %v1290, 0.17677669
      %v1327 = vmul.f32 %v1294, 0.17677669
      %v1328 = vmul.f32 %v1300, 0.17677669
      %v1329 = vmul.f32 %v1304, 0.17677669
      %v1330 = vmul.f32 %v1310, 0.17677669
      %v1331 = vmul.f32 %v1314, 0.17677669
      %v1332 = vmul.f32 %v1320, 0.17677669
      %v1333 = vpack.c.bf16 %v1327, %v1326
      %v1334 = vpack.c.bf16 %v1329, %v1328
      %v1335 = vpack.c.bf16 %v1331, %v1330
      %v1336 = vpack.c.bf16 %v1332, %v1332
      %v1337 = vpack.c.bf16 %v1296, %v1292
      %v1338 = vpack.c.bf16 %v1306, %v1302
      %v1339 = vpack.c.bf16 %v1316, %v1312
      %v1340 = vpack.c.bf16 0.0, %v1322
      %v1341 = vpack.c.bf16 0.0, 0.0
      %v1343 = vlaneseq
      %v1344 = vshrl.u32 %v1343, 7
      %v1345 = vsub.s32 0, %v1344
      %v1346 = vrot.slane %v625, %v1345
      %vm1348 = vcmask 261120
      %v1350 = vsel %vm1348, %v1333, 0
      %v1353 = vsel %vm1348, %v1334, 0
      %v1356 = vsel %vm1348, %v1335, 0
      %v1359 = vsel %vm1348, %v1336, 0
      %v1362 = vsel %vm1348, %v1337, 0
      %v1365 = vsel %vm1348, %v1338, 0
      %v1368 = vsel %vm1348, %v1339, 0
      %v1371 = vsel %vm1348, %v1340, 0
      %v1374 = vsel %vm1348, %v1341, 0
      %1376 = vmatprep.subr.bf16.mxu0 0
      %1377 = vmatpush1.bf16.xpose.msra.mxu0 %v1362
      %1378 = vmatprep.subr.bf16.mxu0 0
      %1379 = vmatpush1.bf16.xpose.msra.mxu0 %v1365
      %1380 = vmatprep.subr.bf16.mxu0 0
      %1381 = vmatpush1.bf16.xpose.msra.mxu0 %v1368
      %1382 = vmatprep.subr.bf16.mxu0 0
      %1383 = vmatpush1.bf16.xpose.msra.mxu0 %v1371
      %1384 = vmatprep.subr.bf16.mxu0 0
      %1385 = vmatpush1.bf16.xpose.msra.mxu0 %v1374
      %1386 = vmatprep.subr.bf16.mxu0 0
      %1387 = vmatpush1.bf16.xpose.msra.mxu0 %v1374
      %1388 = vmatprep.subr.bf16.mxu0 0
      %1389 = vmatpush1.bf16.xpose.msra.mxu0 %v1374
      %1390 = vmatprep.subr.bf16.mxu0 0
      %1391 = vmatpush1.bf16.xpose.msra.mxu0 %v1374
      %1392 = vmatprep.subr.bf16.mxu0 0
      %1393 = vmatpush1.bf16.xpose.msra.mxu0 0
      %1394 = vmatprep.subr.bf16.mxu0 0
      %1395 = vmatpush1.bf16.xpose.msra.mxu0 0
      %1396 = vmatprep.subr.bf16.mxu0 0
      %1397 = vmatpush1.bf16.xpose.msra.mxu0 0
      %1398 = vmatprep.subr.bf16.mxu0 0
      %1399 = vmatpush1.bf16.xpose.msra.mxu0 0
      %1400 = vmatprep.subr.bf16.mxu0 0
      %1401 = vmatpush1.bf16.xpose.msra.mxu0 0
      %1402 = vmatprep.subr.bf16.mxu0 0
      %1403 = vmatpush1.bf16.xpose.msra.mxu0 0
      %1404 = vmatprep.subr.bf16.mxu0 0
      %1405 = vmatpush1.bf16.xpose.msra.mxu0 0
      %1406 = vmatprep.subr.bf16.mxu0 0
      %1407 = vmatpush1.bf16.xpose.msra.mxu0 0
      %1408 = vmatprep.mubr.bf16.mxu0 0
      %1409 = vmatmul.mubr.bf16.gmra.mrb[0].mxu0 %v1350
      %v1410 = vpop.f32.mrb[0].mxu0
      %v1411 = vadd.f32 %v1346, %v1410
      %v1412 = vpop.f32.mrb[0].mxu0
      %v1413 = vpop.f32.mrb[0].mxu0
      %v1414 = vadd.f32 %v1346, %v1413
      %v1415 = vpop.f32.mrb[0].mxu0
      %1416 = vmatprep.mubr.bf16.mxu0 0
      %1417 = vmatmul.mubr.bf16.gmra.mrb[0].mxu0 %v1353
      %v1418 = vpop.f32.mrb[0].mxu0
      %v1419 = vadd.f32 %v1346, %v1418
      %v1420 = vpop.f32.mrb[0].mxu0
      %v1421 = vpop.f32.mrb[0].mxu0
      %v1422 = vadd.f32 %v1346, %v1421
      %v1423 = vpop.f32.mrb[0].mxu0
      %1424 = vmatprep.mubr.bf16.mxu0 0
      %1425 = vmatmul.mubr.bf16.gmra.mrb[0].mxu0 %v1356
      %v1426 = vpop.f32.mrb[0].mxu0
      %v1427 = vadd.f32 %v1346, %v1426
      %v1428 = vpop.f32.mrb[0].mxu0
      %v1429 = vpop.f32.mrb[0].mxu0
      %v1430 = vadd.f32 %v1346, %v1429
      %v1431 = vpop.f32.mrb[0].mxu0
      %1432 = vmatprep.mubr.bf16.mxu0 0
      %1433 = vmatmul.mubr.bf16.gmra.mrb[0].mxu0 %v1359
      %v1434 = vpop.f32.mrb[0].mxu0
      %v1435 = vadd.f32 %v1346, %v1434
      %v1436 = vpop.f32.mrb[0].mxu0
      %v1437 = vpop.f32.mrb[0].mxu0
      %v1438 = vpop.f32.mrb[0].mxu0
      %1439 = vdwg.mxu0
      %1440 = vmax.xlane.f32.xlu0 %v1411
      %v1441 = vpop.xlane.xlu0 %1440
      %1442 = vmax.xlane.f32.xlu0 %v1414
      %v1443 = vpop.xlane.xlu0 %1442
      %1444 = vmax.xlane.f32.xlu0 %v1419
      %v1445 = vpop.xlane.xlu0 %1444
      %1446 = vmax.xlane.f32.xlu0 %v1422
      %v1447 = vpop.xlane.xlu0 %1446
      %1448 = vmax.xlane.f32.xlu0 %v1427
      %v1449 = vpop.xlane.xlu0 %1448
      %1450 = vmax.xlane.f32.xlu0 %v1430
      %v1451 = vpop.xlane.xlu0 %1450
      %1452 = vmax.xlane.f32.xlu0 %v1435
      %v1453 = vpop.xlane.xlu0 %1452
      %v1454 = vsub.f32 %v1411, %v1441
      %v1455 = vsub.f32 %v1414, %v1443
      %v1456 = vsub.f32 %v1419, %v1445
      %v1457 = vsub.f32 %v1422, %v1447
      %v1458 = vsub.f32 %v1427, %v1449
      %v1459 = vsub.f32 %v1430, %v1451
      %v1460 = vsub.f32 %v1435, %v1453
      %v1461 = vmul.f32 %v1454, 1.442695
      %v1462 = vpow.pop %v1461
      %v1463 = vmul.f32 %v1455, 1.442695
      %v1464 = vpow.pop %v1463
      %v1465 = vmul.f32 %v1456, 1.442695
      %v1466 = vpow.pop %v1465
      %v1467 = vmul.f32 %v1457, 1.442695
      %v1468 = vpow.pop %v1467
      %v1469 = vmul.f32 %v1458, 1.442695
      %v1470 = vpow.pop %v1469
      %v1471 = vmul.f32 %v1459, 1.442695
      %v1472 = vpow.pop %v1471
      %v1473 = vmul.f32 %v1460, 1.442695
      %v1474 = vpow.pop %v1473
      %1475 = vadd.xlane.f32.xlu0 %v1462
      %v1476 = vpop.xlane.xlu0 %1475
      %1477 = vadd.xlane.f32.xlu0 %v1464
      %v1478 = vpop.xlane.xlu0 %1477
      %1479 = vadd.xlane.f32.xlu0 %v1466
      %v1480 = vpop.xlane.xlu0 %1479
      %1481 = vadd.xlane.f32.xlu0 %v1468
      %v1482 = vpop.xlane.xlu0 %1481
      %1483 = vadd.xlane.f32.xlu0 %v1470
      %v1484 = vpop.xlane.xlu0 %1483
      %1485 = vadd.xlane.f32.xlu0 %v1472
      %v1486 = vpop.xlane.xlu0 %1485
      %1487 = vadd.xlane.f32.xlu0 %v1474
      %v1488 = vpop.xlane.xlu0 %1487
      %v1489 = vrcp.pop %v1476
      %v1490 = vmul.f32 %v1462, %v1489
      %v1491 = vrcp.pop %v1478
      %v1492 = vmul.f32 %v1464, %v1491
      %v1493 = vrcp.pop %v1480
      %v1494 = vmul.f32 %v1466, %v1493
      %v1495 = vrcp.pop %v1482
      %v1496 = vmul.f32 %v1468, %v1495
      %v1497 = vrcp.pop %v1484
      %v1498 = vmul.f32 %v1470, %v1497
      %v1499 = vrcp.pop %v1486
      %v1500 = vmul.f32 %v1472, %v1499
      %v1501 = vrcp.pop %v1488
      %v1502 = vmul.f32 %v1474, %v1501
      %1503 = vst [vmem:[%s602] sm:$0xff] %v1490
      %1504 = vst [vmem:[%s602 + $0x8] sm:$0xff] %v1492
      %1505 = vst [vmem:[%s602 + $0x10] sm:$0xff] %v1494
      %1506 = vst [vmem:[%s602 + $0x18] sm:$0xff] %v1496
      %1507 = vst [vmem:[%s602 + $0x20] sm:$0xff] %v1498
      %1508 = vst [vmem:[%s602 + $0x28] sm:$0xff] %v1500
      %1509 = vst [vmem:[%s602 + $0x30] sm:$0xff] %v1502
      %1514 = vrot.lane.b32.xlu0 %v1333, 96
      %v1515 = vpop.permute.xlu0 %1514
      %1516 = vrot.lane.b32.xlu0 %v1334, 96
      %v1517 = vpop.permute.xlu0 %1516
      %1518 = vrot.lane.b32.xlu0 %v1335, 96
      %v1519 = vpop.permute.xlu0 %1518
      %1520 = vrot.lane.b32.xlu0 %v1336, 96
      %v1521 = vpop.permute.xlu0 %1520
      %1527 = vrot.lane.b32.xlu0 %v1337, 96
      %v1528 = vpop.permute.xlu0 %1527
      %1529 = vrot.lane.b32.xlu0 %v1338, 96
      %v1530 = vpop.permute.xlu0 %1529
      %1531 = vrot.lane.b32.xlu0 %v1339, 96
      %v1532 = vpop.permute.xlu0 %1531
      %1533 = vrot.lane.b32.xlu0 %v1340, 96
      %v1534 = vpop.permute.xlu0 %1533
      %1535 = vrot.lane.b32.xlu0 %v1341, 96
      %v1536 = vpop.permute.xlu0 %1535
      %v1538 = vsel %vm1348, %v1515, 0
      %v1541 = vsel %vm1348, %v1517, 0
      %v1544 = vsel %vm1348, %v1519, 0
      %v1547 = vsel %vm1348, %v1521, 0
      %v1550 = vsel %vm1348, %v1528, 0
      %v1553 = vsel %vm1348, %v1530, 0
      %v1556 = vsel %vm1348, %v1532, 0
      %v1559 = vsel %vm1348, %v1534, 0
      %v1562 = vsel %vm1348, %v1536, 0
      %1564 = vmatprep.subr.bf16.mxu0 0
      %1565 = vmatpush1.bf16.xpose.msra.mxu0 %v1550
      %1566 = vmatprep.subr.bf16.mxu0 0
      %1567 = vmatpush1.bf16.xpose.msra.mxu0 %v1553
      %1568 = vmatprep.subr.bf16.mxu0 0
      %1569 = vmatpush1.bf16.xpose.msra.mxu0 %v1556
      %1570 = vmatprep.subr.bf16.mxu0 0
      %1571 = vmatpush1.bf16.xpose.msra.mxu0 %v1559
      %1572 = vmatprep.subr.bf16.mxu0 0
      %1573 = vmatpush1.bf16.xpose.msra.mxu0 %v1562
      %1574 = vmatprep.subr.bf16.mxu0 0
      %1575 = vmatpush1.bf16.xpose.msra.mxu0 %v1562
      %1576 = vmatprep.subr.bf16.mxu0 0
      %1577 = vmatpush1.bf16.xpose.msra.mxu0 %v1562
      %1578 = vmatprep.subr.bf16.mxu0 0
      %1579 = vmatpush1.bf16.xpose.msra.mxu0 %v1562
      %1580 = vmatprep.subr.bf16.mxu0 0
      %1581 = vmatpush1.bf16.xpose.msra.mxu0 0
      %1582 = vmatprep.subr.bf16.mxu0 0
      %1583 = vmatpush1.bf16.xpose.msra.mxu0 0
      %1584 = vmatprep.subr.bf16.mxu0 0
      %1585 = vmatpush1.bf16.xpose.msra.mxu0 0
      %1586 = vmatprep.subr.bf16.mxu0 0
      %1587 = vmatpush1.bf16.xpose.msra.mxu0 0
      %1588 = vmatprep.subr.bf16.mxu0 0
      %1589 = vmatpush1.bf16.xpose.msra.mxu0 0
      %1590 = vmatprep.subr.bf16.mxu0 0
      %1591 = vmatpush1.bf16.xpose.msra.mxu0 0
      %1592 = vmatprep.subr.bf16.mxu0 0
      %1593 = vmatpush1.bf16.xpose.msra.mxu0 0
      %1594 = vmatprep.subr.bf16.mxu0 0
      %1595 = vmatpush1.bf16.xpose.msra.mxu0 0
      %1596 = vmatprep.mubr.bf16.mxu0 0
      %1597 = vmatmul.mubr.bf16.gmra.mrb[0].mxu0 %v1538
      %v1598 = vpop.f32.mrb[0].mxu0
      %v1599 = vadd.f32 %v1346, %v1598
      %v1600 = vpop.f32.mrb[0].mxu0
      %v1601 = vpop.f32.mrb[0].mxu0
      %v1602 = vadd.f32 %v1346, %v1601
      %v1603 = vpop.f32.mrb[0].mxu0
      %1604 = vmatprep.mubr.bf16.mxu0 0
      %1605 = vmatmul.mubr.bf16.gmra.mrb[0].mxu0 %v1541
      %v1606 = vpop.f32.mrb[0].mxu0
      %v1607 = vadd.f32 %v1346, %v1606
      %v1608 = vpop.f32.mrb[0].mxu0
      %v1609 = vpop.f32.mrb[0].mxu0
      %v1610 = vadd.f32 %v1346, %v1609
      %v1611 = vpop.f32.mrb[0].mxu0
      %1612 = vmatprep.mubr.bf16.mxu0 0
      %1613 = vmatmul.mubr.bf16.gmra.mrb[0].mxu0 %v1544
      %v1614 = vpop.f32.mrb[0].mxu0
      %v1615 = vadd.f32 %v1346, %v1614
      %v1616 = vpop.f32.mrb[0].mxu0
      %v1617 = vpop.f32.mrb[0].mxu0
      %v1618 = vadd.f32 %v1346, %v1617
      %v1619 = vpop.f32.mrb[0].mxu0
      %1620 = vmatprep.mubr.bf16.mxu0 0
      %1621 = vmatmul.mubr.bf16.gmra.mrb[0].mxu0 %v1547
      %v1622 = vpop.f32.mrb[0].mxu0
      %v1623 = vadd.f32 %v1346, %v1622
      %v1624 = vpop.f32.mrb[0].mxu0
      %v1625 = vpop.f32.mrb[0].mxu0
      %v1626 = vpop.f32.mrb[0].mxu0
      %1627 = vdwg.mxu0
      %1628 = vmax.xlane.f32.xlu0 %v1599
      %v1629 = vpop.xlane.xlu0 %1628
      %1630 = vmax.xlane.f32.xlu0 %v1602
      %v1631 = vpop.xlane.xlu0 %1630
      %1632 = vmax.xlane.f32.xlu0 %v1607
      %v1633 = vpop.xlane.xlu0 %1632
      %1634 = vmax.xlane.f32.xlu0 %v1610
      %v1635 = vpop.xlane.xlu0 %1634
      %1636 = vmax.xlane.f32.xlu0 %v1615
      %v1637 = vpop.xlane.xlu0 %1636
      %1638 = vmax.xlane.f32.xlu0 %v1618
      %v1639 = vpop.xlane.xlu0 %1638
      %1640 = vmax.xlane.f32.xlu0 %v1623
      %v1641 = vpop.xlane.xlu0 %1640
      %v1642 = vsub.f32 %v1599, %v1629
      %v1643 = vsub.f32 %v1602, %v1631
      %v1644 = vsub.f32 %v1607, %v1633
      %v1645 = vsub.f32 %v1610, %v1635
      %v1646 = vsub.f32 %v1615, %v1637
      %v1647 = vsub.f32 %v1618, %v1639
      %v1648 = vsub.f32 %v1623, %v1641
      %v1649 = vmul.f32 %v1642, 1.442695
      %v1650 = vpow.pop %v1649
      %v1651 = vmul.f32 %v1643, 1.442695
      %v1652 = vpow.pop %v1651
      %v1653 = vmul.f32 %v1644, 1.442695
      %v1654 = vpow.pop %v1653
      %v1655 = vmul.f32 %v1645, 1.442695
      %v1656 = vpow.pop %v1655
      %v1657 = vmul.f32 %v1646, 1.442695
      %v1658 = vpow.pop %v1657
      %v1659 = vmul.f32 %v1647, 1.442695
      %v1660 = vpow.pop %v1659
      %v1661 = vmul.f32 %v1648, 1.442695
      %v1662 = vpow.pop %v1661
      %1663 = vadd.xlane.f32.xlu0 %v1650
      %v1664 = vpop.xlane.xlu0 %1663
      %1665 = vadd.xlane.f32.xlu0 %v1652
      %v1666 = vpop.xlane.xlu0 %1665
      %1667 = vadd.xlane.f32.xlu0 %v1654
      %v1668 = vpop.xlane.xlu0 %1667
      %1669 = vadd.xlane.f32.xlu0 %v1656
      %v1670 = vpop.xlane.xlu0 %1669
      %1671 = vadd.xlane.f32.xlu0 %v1658
      %v1672 = vpop.xlane.xlu0 %1671
      %1673 = vadd.xlane.f32.xlu0 %v1660
      %v1674 = vpop.xlane.xlu0 %1673
      %1675 = vadd.xlane.f32.xlu0 %v1662
      %v1676 = vpop.xlane.xlu0 %1675
      %v1677 = vrcp.pop %v1664
      %v1678 = vmul.f32 %v1650, %v1677
      %v1679 = vrcp.pop %v1666
      %v1680 = vmul.f32 %v1652, %v1679
      %v1681 = vrcp.pop %v1668
      %v1682 = vmul.f32 %v1654, %v1681
      %v1683 = vrcp.pop %v1670
      %v1684 = vmul.f32 %v1656, %v1683
      %v1685 = vrcp.pop %v1672
      %v1686 = vmul.f32 %v1658, %v1685
      %v1687 = vrcp.pop %v1674
      %v1688 = vmul.f32 %v1660, %v1687
      %v1689 = vrcp.pop %v1676
      %v1690 = vmul.f32 %v1662, %v1689
      %s1691 = scalar_lea.vmem %s602, 56
      %1692 = vst [vmem:[%s1691] sm:$0xff] %v1678
      %1693 = vst [vmem:[%s1691 + $0x8] sm:$0xff] %v1680
      %1694 = vst [vmem:[%s1691 + $0x10] sm:$0xff] %v1682
      %1695 = vst [vmem:[%s1691 + $0x18] sm:$0xff] %v1684
      %1696 = vst [vmem:[%s1691 + $0x20] sm:$0xff] %v1686
      %1697 = vst [vmem:[%s1691 + $0x28] sm:$0xff] %v1688
      %1698 = vst [vmem:[%s1691 + $0x30] sm:$0xff] %v1690
      %1699 = vrot.lane.b32.xlu0 %v1333, 64
      %v1700 = vpop.permute.xlu0 %1699
      %1701 = vrot.lane.b32.xlu0 %v1334, 64
      %v1702 = vpop.permute.xlu0 %1701
      %1703 = vrot.lane.b32.xlu0 %v1335, 64
      %v1704 = vpop.permute.xlu0 %1703
      %1705 = vrot.lane.b32.xlu0 %v1336, 64
      %v1706 = vpop.permute.xlu0 %1705
      %1707 = vrot.lane.b32.xlu0 %v1337, 64
      %v1708 = vpop.permute.xlu0 %1707
      %1709 = vrot.lane.b32.xlu0 %v1338, 64
      %v1710 = vpop.permute.xlu0 %1709
      %1711 = vrot.lane.b32.xlu0 %v1339, 64
      %v1712 = vpop.permute.xlu0 %1711
      %1713 = vrot.lane.b32.xlu0 %v1340, 64
      %v1714 = vpop.permute.xlu0 %1713
      %1715 = vrot.lane.b32.xlu0 %v1341, 64
      %v1716 = vpop.permute.xlu0 %1715
      %v1718 = vsel %vm1348, %v1700, 0
      %v1721 = vsel %vm1348, %v1702, 0
      %v1724 = vsel %vm1348, %v1704, 0
      %v1727 = vsel %vm1348, %v1706, 0
      %v1730 = vsel %vm1348, %v1708, 0
      %v1733 = vsel %vm1348, %v1710, 0
      %v1736 = vsel %vm1348, %v1712, 0
      %v1739 = vsel %vm1348, %v1714, 0
      %v1742 = vsel %vm1348, %v1716, 0
      %1744 = vmatprep.subr.bf16.mxu0 0
      %1745 = vmatpush1.bf16.xpose.msra.mxu0 %v1730
      %1746 = vmatprep.subr.bf16.mxu0 0
      %1747 = vmatpush1.bf16.xpose.msra.mxu0 %v1733
      %1748 = vmatprep.subr.bf16.mxu0 0
      %1749 = vmatpush1.bf16.xpose.msra.mxu0 %v1736
      %1750 = vmatprep.subr.bf16.mxu0 0
      %1751 = vmatpush1.bf16.xpose.msra.mxu0 %v1739
      %1752 = vmatprep.subr.bf16.mxu0 0
      %1753 = vmatpush1.bf16.xpose.msra.mxu0 %v1742
      %1754 = vmatprep.subr.bf16.mxu0 0
      %1755 = vmatpush1.bf16.xpose.msra.mxu0 %v1742
      %1756 = vmatprep.subr.bf16.mxu0 0
      %1757 = vmatpush1.bf16.xpose.msra.mxu0 %v1742
      %1758 = vmatprep.subr.bf16.mxu0 0
      %1759 = vmatpush1.bf16.xpose.msra.mxu0 %v1742
      %1760 = vmatprep.subr.bf16.mxu0 0
      %1761 = vmatpush1.bf16.xpose.msra.mxu0 0
      %1762 = vmatprep.subr.bf16.mxu0 0
      %1763 = vmatpush1.bf16.xpose.msra.mxu0 0
      %1764 = vmatprep.subr.bf16.mxu0 0
      %1765 = vmatpush1.bf16.xpose.msra.mxu0 0
      %1766 = vmatprep.subr.bf16.mxu0 0
      %1767 = vmatpush1.bf16.xpose.msra.mxu0 0
      %1768 = vmatprep.subr.bf16.mxu0 0
      %1769 = vmatpush1.bf16.xpose.msra.mxu0 0
      %1770 = vmatprep.subr.bf16.mxu0 0
      %1771 = vmatpush1.bf16.xpose.msra.mxu0 0
      %1772 = vmatprep.subr.bf16.mxu0 0
      %1773 = vmatpush1.bf16.xpose.msra.mxu0 0
      %1774 = vmatprep.subr.bf16.mxu0 0
      %1775 = vmatpush1.bf16.xpose.msra.mxu0 0
      %1776 = vmatprep.mubr.bf16.mxu0 0
      %1777 = vmatmul.mubr.bf16.gmra.mrb[0].mxu0 %v1718
      %v1778 = vpop.f32.mrb[0].mxu0
      %v1779 = vadd.f32 %v1346, %v1778
      %v1780 = vpop.f32.mrb[0].mxu0
      %v1781 = vpop.f32.mrb[0].mxu0
      %v1782 = vadd.f32 %v1346, %v1781
      %v1783 = vpop.f32.mrb[0].mxu0
      %1784 = vmatprep.mubr.bf16.mxu0 0
      %1785 = vmatmul.mubr.bf16.gmra.mrb[0].mxu0 %v1721
      %v1786 = vpop.f32.mrb[0].mxu0
      %v1787 = vadd.f32 %v1346, %v1786
      %v1788 = vpop.f32.mrb[0].mxu0
      %v1789 = vpop.f32.mrb[0].mxu0
      %v1790 = vadd.f32 %v1346, %v1789
      %v1791 = vpop.f32.mrb[0].mxu0
      %1792 = vmatprep.mubr.bf16.mxu0 0
      %1793 = vmatmul.mubr.bf16.gmra.mrb[0].mxu0 %v1724
      %v1794 = vpop.f32.mrb[0].mxu0
      %v1795 = vadd.f32 %v1346, %v1794
      %v1796 = vpop.f32.mrb[0].mxu0
      %v1797 = vpop.f32.mrb[0].mxu0
      %v1798 = vadd.f32 %v1346, %v1797
      %v1799 = vpop.f32.mrb[0].mxu0
      %1800 = vmatprep.mubr.bf16.mxu0 0
      %1801 = vmatmul.mubr.bf16.gmra.mrb[0].mxu0 %v1727
      %v1802 = vpop.f32.mrb[0].mxu0
      %v1803 = vadd.f32 %v1346, %v1802
      %v1804 = vpop.f32.mrb[0].mxu0
      %v1805 = vpop.f32.mrb[0].mxu0
      %v1806 = vpop.f32.mrb[0].mxu0
      %1807 = vdwg.mxu0
      %1808 = vmax.xlane.f32.xlu0 %v1779
      %v1809 = vpop.xlane.xlu0 %1808
      %1810 = vmax.xlane.f32.xlu0 %v1782
      %v1811 = vpop.xlane.xlu0 %1810
      %1812 = vmax.xlane.f32.xlu0 %v1787
      %v1813 = vpop.xlane.xlu0 %1812
      %1814 = vmax.xlane.f32.xlu0 %v1790
      %v1815 = vpop.xlane.xlu0 %1814
      %1816 = vmax.xlane.f32.xlu0 %v1795
      %v1817 = vpop.xlane.xlu0 %1816
      %1818 = vmax.xlane.f32.xlu0 %v1798
      %v1819 = vpop.xlane.xlu0 %1818
      %1820 = vmax.xlane.f32.xlu0 %v1803
      %v1821 = vpop.xlane.xlu0 %1820
      %v1822 = vsub.f32 %v1779, %v1809
      %v1823 = vsub.f32 %v1782, %v1811
      %v1824 = vsub.f32 %v1787, %v1813
      %v1825 = vsub.f32 %v1790, %v1815
      %v1826 = vsub.f32 %v1795, %v1817
      %v1827 = vsub.f32 %v1798, %v1819
      %v1828 = vsub.f32 %v1803, %v1821
      %v1829 = vmul.f32 %v1822, 1.442695
      %v1830 = vpow.pop %v1829
      %v1831 = vmul.f32 %v1823, 1.442695
      %v1832 = vpow.pop %v1831
      %v1833 = vmul.f32 %v1824, 1.442695
      %v1834 = vpow.pop %v1833
      %v1835 = vmul.f32 %v1825, 1.442695
      %v1836 = vpow.pop %v1835
      %v1837 = vmul.f32 %v1826, 1.442695
      %v1838 = vpow.pop %v1837
      %v1839 = vmul.f32 %v1827, 1.442695
      %v1840 = vpow.pop %v1839
      %v1841 = vmul.f32 %v1828, 1.442695
      %v1842 = vpow.pop %v1841
      %1843 = vadd.xlane.f32.xlu0 %v1830
      %v1844 = vpop.xlane.xlu0 %1843
      %1845 = vadd.xlane.f32.xlu0 %v1832
      %v1846 = vpop.xlane.xlu0 %1845
      %1847 = vadd.xlane.f32.xlu0 %v1834
      %v1848 = vpop.xlane.xlu0 %1847
      %1849 = vadd.xlane.f32.xlu0 %v1836
      %v1850 = vpop.xlane.xlu0 %1849
      %1851 = vadd.xlane.f32.xlu0 %v1838
      %v1852 = vpop.xlane.xlu0 %1851
      %1853 = vadd.xlane.f32.xlu0 %v1840
      %v1854 = vpop.xlane.xlu0 %1853
      %1855 = vadd.xlane.f32.xlu0 %v1842
      %v1856 = vpop.xlane.xlu0 %1855
      %v1857 = vrcp.pop %v1844
      %v1858 = vmul.f32 %v1830, %v1857
      %v1859 = vrcp.pop %v1846
      %v1860 = vmul.f32 %v1832, %v1859
      %v1861 = vrcp.pop %v1848
      %v1862 = vmul.f32 %v1834, %v1861
      %v1863 = vrcp.pop %v1850
      %v1864 = vmul.f32 %v1836, %v1863
      %v1865 = vrcp.pop %v1852
      %v1866 = vmul.f32 %v1838, %v1865
      %v1867 = vrcp.pop %v1854
      %v1868 = vmul.f32 %v1840, %v1867
      %v1869 = vrcp.pop %v1856
      %v1870 = vmul.f32 %v1842, %v1869
      %s1871 = scalar_lea.vmem %s602, 112
      %1872 = vst [vmem:[%s1871] sm:$0xff] %v1858
      %1873 = vst [vmem:[%s1871 + $0x8] sm:$0xff] %v1860
      %1874 = vst [vmem:[%s1871 + $0x10] sm:$0xff] %v1862
      %1875 = vst [vmem:[%s1871 + $0x18] sm:$0xff] %v1864
      %1876 = vst [vmem:[%s1871 + $0x20] sm:$0xff] %v1866
      %1877 = vst [vmem:[%s1871 + $0x28] sm:$0xff] %v1868
      %1878 = vst [vmem:[%s1871 + $0x30] sm:$0xff] %v1870
      %1879 = vrot.lane.b32.xlu0 %v1333, 32
      %v1880 = vpop.permute.xlu0 %1879
      %1881 = vrot.lane.b32.xlu0 %v1334, 32
      %v1882 = vpop.permute.xlu0 %1881
      %1883 = vrot.lane.b32.xlu0 %v1335, 32
      %v1884 = vpop.permute.xlu0 %1883
      %1885 = vrot.lane.b32.xlu0 %v1336, 32
      %v1886 = vpop.permute.xlu0 %1885
      %1887 = vrot.lane.b32.xlu0 %v1337, 32
      %v1888 = vpop.permute.xlu0 %1887
      %1889 = vrot.lane.b32.xlu0 %v1338, 32
      %v1890 = vpop.permute.xlu0 %1889
      %1891 = vrot.lane.b32.xlu0 %v1339, 32
      %v1892 = vpop.permute.xlu0 %1891
      %1893 = vrot.lane.b32.xlu0 %v1340, 32
      %v1894 = vpop.permute.xlu0 %1893
      %1895 = vrot.lane.b32.xlu0 %v1341, 32
      %v1896 = vpop.permute.xlu0 %1895
      %v1898 = vsel %vm1348, %v1880, 0
      %v1901 = vsel %vm1348, %v1882, 0
      %v1904 = vsel %vm1348, %v1884, 0
      %v1907 = vsel %vm1348, %v1886, 0
      %v1910 = vsel %vm1348, %v1888, 0
      %v1913 = vsel %vm1348, %v1890, 0
      %v1916 = vsel %vm1348, %v1892, 0
      %v1919 = vsel %vm1348, %v1894, 0
      %v1922 = vsel %vm1348, %v1896, 0
      %1924 = vmatprep.subr.bf16.mxu0 0
      %1925 = vmatpush1.bf16.xpose.msra.mxu0 %v1910
      %1926 = vmatprep.subr.bf16.mxu0 0
      %1927 = vmatpush1.bf16.xpose.msra.mxu0 %v1913
      %1928 = vmatprep.subr.bf16.mxu0 0
      %1929 = vmatpush1.bf16.xpose.msra.mxu0 %v1916
      %1930 = vmatprep.subr.bf16.mxu0 0
      %1931 = vmatpush1.bf16.xpose.msra.mxu0 %v1919
      %1932 = vmatprep.subr.bf16.mxu0 0
      %1933 = vmatpush1.bf16.xpose.msra.mxu0 %v1922
      %1934 = vmatprep.subr.bf16.mxu0 0
      %1935 = vmatpush1.bf16.xpose.msra.mxu0 %v1922
      %1936 = vmatprep.subr.bf16.mxu0 0
      %1937 = vmatpush1.bf16.xpose.msra.mxu0 %v1922
      %1938 = vmatprep.subr.bf16.mxu0 0
      %1939 = vmatpush1.bf16.xpose.msra.mxu0 %v1922
      %1940 = vmatprep.subr.bf16.mxu0 0
      %1941 = vmatpush1.bf16.xpose.msra.mxu0 0
      %1942 = vmatprep.subr.bf16.mxu0 0
      %1943 = vmatpush1.bf16.xpose.msra.mxu0 0
      %1944 = vmatprep.subr.bf16.mxu0 0
      %1945 = vmatpush1.bf16.xpose.msra.mxu0 0
      %1946 = vmatprep.subr.bf16.mxu0 0
      %1947 = vmatpush1.bf16.xpose.msra.mxu0 0
      %1948 = vmatprep.subr.bf16.mxu0 0
      %1949 = vmatpush1.bf16.xpose.msra.mxu0 0
      %1950 = vmatprep.subr.bf16.mxu0 0
      %1951 = vmatpush1.bf16.xpose.msra.mxu0 0
      %1952 = vmatprep.subr.bf16.mxu0 0
      %1953 = vmatpush1.bf16.xpose.msra.mxu0 0
      %1954 = vmatprep.subr.bf16.mxu0 0
      %1955 = vmatpush1.bf16.xpose.msra.mxu0 0
      %1956 = vmatprep.mubr.bf16.mxu0 0
      %1957 = vmatmul.mubr.bf16.gmra.mrb[0].mxu0 %v1898
      %v1958 = vpop.f32.mrb[0].mxu0
      %v1959 = vadd.f32 %v1346, %v1958
      %v1960 = vpop.f32.mrb[0].mxu0
      %v1961 = vpop.f32.mrb[0].mxu0
      %v1962 = vadd.f32 %v1346, %v1961
      %v1963 = vpop.f32.mrb[0].mxu0
      %1964 = vmatprep.mubr.bf16.mxu0 0
      %1965 = vmatmul.mubr.bf16.gmra.mrb[0].mxu0 %v1901
      %v1966 = vpop.f32.mrb[0].mxu0
      %v1967 = vadd.f32 %v1346, %v1966
      %v1968 = vpop.f32.mrb[0].mxu0
      %v1969 = vpop.f32.mrb[0].mxu0
      %v1970 = vadd.f32 %v1346, %v1969
      %v1971 = vpop.f32.mrb[0].mxu0
      %1972 = vmatprep.mubr.bf16.mxu0 0
      %1973 = vmatmul.mubr.bf16.gmra.mrb[0].mxu0 %v1904
      %v1974 = vpop.f32.mrb[0].mxu0
      %v1975 = vadd.f32 %v1346, %v1974
      %v1976 = vpop.f32.mrb[0].mxu0
      %v1977 = vpop.f32.mrb[0].mxu0
      %v1978 = vadd.f32 %v1346, %v1977
      %v1979 = vpop.f32.mrb[0].mxu0
      %1980 = vmatprep.mubr.bf16.mxu0 0
      %1981 = vmatmul.mubr.bf16.gmra.mrb[0].mxu0 %v1907
      %v1982 = vpop.f32.mrb[0].mxu0
      %v1983 = vadd.f32 %v1346, %v1982
      %v1984 = vpop.f32.mrb[0].mxu0
      %v1985 = vpop.f32.mrb[0].mxu0
      %v1986 = vpop.f32.mrb[0].mxu0
      %1987 = vdwg.mxu0
      %1988 = vmax.xlane.f32.xlu0 %v1959
      %v1989 = vpop.xlane.xlu0 %1988
      %1990 = vmax.xlane.f32.xlu0 %v1962
      %v1991 = vpop.xlane.xlu0 %1990
      %1992 = vmax.xlane.f32.xlu0 %v1967
      %v1993 = vpop.xlane.xlu0 %1992
      %1994 = vmax.xlane.f32.xlu0 %v1970
      %v1995 = vpop.xlane.xlu0 %1994
      %1996 = vmax.xlane.f32.xlu0 %v1975
      %v1997 = vpop.xlane.xlu0 %1996
      %1998 = vmax.xlane.f32.xlu0 %v1978
      %v1999 = vpop.xlane.xlu0 %1998
      %2000 = vmax.xlane.f32.xlu0 %v1983
      %v2001 = vpop.xlane.xlu0 %2000
      %v2002 = vsub.f32 %v1959, %v1989
      %v2003 = vsub.f32 %v1962, %v1991
      %v2004 = vsub.f32 %v1967, %v1993
      %v2005 = vsub.f32 %v1970, %v1995
      %v2006 = vsub.f32 %v1975, %v1997
      %v2007 = vsub.f32 %v1978, %v1999
      %v2008 = vsub.f32 %v1983, %v2001
      %v2009 = vmul.f32 %v2002, 1.442695
      %v2010 = vpow.pop %v2009
      %v2011 = vmul.f32 %v2003, 1.442695
      %v2012 = vpow.pop %v2011
      %v2013 = vmul.f32 %v2004, 1.442695
      %v2014 = vpow.pop %v2013
      %v2015 = vmul.f32 %v2005, 1.442695
      %v2016 = vpow.pop %v2015
      %v2017 = vmul.f32 %v2006, 1.442695
      %v2018 = vpow.pop %v2017
      %v2019 = vmul.f32 %v2007, 1.442695
      %v2020 = vpow.pop %v2019
      %v2021 = vmul.f32 %v2008, 1.442695
      %v2022 = vpow.pop %v2021
      %2023 = vadd.xlane.f32.xlu0 %v2010
      %v2024 = vpop.xlane.xlu0 %2023
      %2025 = vadd.xlane.f32.xlu0 %v2012
      %v2026 = vpop.xlane.xlu0 %2025
      %2027 = vadd.xlane.f32.xlu0 %v2014
      %v2028 = vpop.xlane.xlu0 %2027
      %2029 = vadd.xlane.f32.xlu0 %v2016
      %v2030 = vpop.xlane.xlu0 %2029
      %2031 = vadd.xlane.f32.xlu0 %v2018
      %v2032 = vpop.xlane.xlu0 %2031
      %2033 = vadd.xlane.f32.xlu0 %v2020
      %v2034 = vpop.xlane.xlu0 %2033
      %2035 = vadd.xlane.f32.xlu0 %v2022
      %v2036 = vpop.xlane.xlu0 %2035
      %v2037 = vrcp.pop %v2024
      %v2038 = vmul.f32 %v2010, %v2037
      %v2039 = vrcp.pop %v2026
      %v2040 = vmul.f32 %v2012, %v2039
      %v2041 = vrcp.pop %v2028
      %v2042 = vmul.f32 %v2014, %v2041
      %v2043 = vrcp.pop %v2030
      %v2044 = vmul.f32 %v2016, %v2043
      %v2045 = vrcp.pop %v2032
      %v2046 = vmul.f32 %v2018, %v2045
      %v2047 = vrcp.pop %v2034
      %v2048 = vmul.f32 %v2020, %v2047
      %v2049 = vrcp.pop %v2036
      %v2050 = vmul.f32 %v2022, %v2049
      %s2051 = scalar_lea.vmem %s602, 168
      %2052 = vst [vmem:[%s2051] sm:$0xff] %v2038
      %2053 = vst [vmem:[%s2051 + $0x8] sm:$0xff] %v2040
      %2054 = vst [vmem:[%s2051 + $0x10] sm:$0xff] %v2042
      %2055 = vst [vmem:[%s2051 + $0x18] sm:$0xff] %v2044
      %2056 = vst [vmem:[%s2051 + $0x20] sm:$0xff] %v2046
      %2057 = vst [vmem:[%s2051 + $0x28] sm:$0xff] %v2048
      %2058 = vst [vmem:[%s2051 + $0x30] sm:$0xff] %v2050
      %v2059 = vld [vmem:[%s11] sm:$0xff]
      %v2060 = vld [vmem:[%s11 + $0x8] sm:$0xff]
      %v2061 = vld [vmem:[%s11 + $0x10] sm:$0xff]
      %v2062 = vld [vmem:[%s11 + $0x18] sm:$0xff]
      %v2063 = vld [vmem:[%s11 + $0x20] sm:$0xff]
      %v2064 = vld [vmem:[%s11 + $0x28] sm:$0xff]
      %v2065 = vld [vmem:[%s11 + $0x30] sm:$0xff]
      %v2066 = vld [vmem:[%s11 + $0x38] sm:$0xff]
      %v2067 = vld [vmem:[%s11 + $0x40] sm:$0xff]
      %v2068 = vld [vmem:[%s11 + $0x48] sm:$0xff]
      %v2069 = vld [vmem:[%s11 + $0x50] sm:$0xff]
      %v2070 = vld [vmem:[%s11 + $0x58] sm:$0xff]
      %v2071 = vld [vmem:[%s11 + $0x60] sm:$0xff]
      %v2072 = vld [vmem:[%s11 + $0x68] sm:$0xff]
      %v2073 = vld [vmem:[%s11 + $0x70] sm:$0xff]
      %v2074 = vld [vmem:[%s11 + $0x78] sm:$0xff]
      %v2075 = vld [vmem:[%s12] sm:$0x3]
      %v2077 = vlaneseq
      %v2078 = vshrl.u32 %v2077, 7
      %v2079 = vsub.s32 0, %v2078
      %v2080 = vrot.slane %v2075, %v2079
      %v2081 = vlaneseq
      %v2082 = vshrl.u32 %v2081, 7
      %v2083 = vsub.s32 1, %v2082
      %v2084 = vrot.slane %v2075, %v2083
      %v2103 = vunpack.c.l.b16 %v2059
      %v2104 = vunpack.c.h.b16 %v2059
      %v2105 = vunpack.c.l.b16 %v2060
      %v2106 = vunpack.c.h.b16 %v2060
      %v2107 = vunpack.c.l.b16 %v2061
      %v2108 = vunpack.c.h.b16 %v2061
      %v2109 = vunpack.c.l.b16 %v2062
      %v2110 = vunpack.c.h.b16 %v2062
      %v2111 = vunpack.c.l.b16 %v2063
      %v2112 = vunpack.c.h.b16 %v2063
      %v2113 = vunpack.c.l.b16 %v2064
      %v2114 = vunpack.c.h.b16 %v2064
      %v2115 = vunpack.c.l.b16 %v2065
      %v2116 = vunpack.c.h.b16 %v2065
      %v2117 = vunpack.c.l.b16 %v2066
      %v2118 = vunpack.c.h.b16 %v2066
      %v2119 = vunpack.c.l.b16 %v2067
      %v2120 = vunpack.c.h.b16 %v2067
      %v2121 = vunpack.c.l.b16 %v2068
      %v2122 = vunpack.c.h.b16 %v2068
      %v2123 = vunpack.c.l.b16 %v2069
      %v2124 = vunpack.c.h.b16 %v2069
      %v2125 = vunpack.c.l.b16 %v2070
      %v2126 = vunpack.c.h.b16 %v2070
      %v2127 = vunpack.c.l.b16 %v2071
      %v2128 = vunpack.c.h.b16 %v2071
      %v2129 = vunpack.c.l.b16 %v2072
      %v2130 = vunpack.c.h.b16 %v2072
      %v2131 = vunpack.c.l.b16 %v2073
      %v2132 = vunpack.c.h.b16 %v2073
      %v2133 = vunpack.c.l.b16 %v2074
      %v2134 = vunpack.c.h.b16 %v2074
      %v2135 = vpack.c.b16 %v2105, %v2103
      %v2136 = vpack.c.b16 %v2106, %v2104
      %v2137 = vpack.c.b16 %v2109, %v2107
      %v2138 = vpack.c.b16 %v2110, %v2108
      %v2139 = vpack.c.b16 %v2113, %v2111
      %v2140 = vpack.c.b16 %v2114, %v2112
      %v2141 = vpack.c.b16 %v2117, %v2115
      %v2142 = vpack.c.b16 %v2118, %v2116
      %v2143 = vpack.c.b16 %v2121, %v2119
      %v2144 = vpack.c.b16 %v2122, %v2120
      %v2145 = vpack.c.b16 %v2125, %v2123
      %v2146 = vpack.c.b16 %v2126, %v2124
      %v2147 = vpack.c.b16 %v2129, %v2127
      %v2148 = vpack.c.b16 %v2130, %v2128
      %v2149 = vpack.c.b16 %v2133, %v2131
      %v2150 = vpack.c.b16 %v2134, %v2132
      %2167 = vmatprep.subr.bf16.mxu0 %v2136
      %2168 = vmatpush1.bf16.msra.mxu0 %v2135
      %2169 = vmatprep.subr.bf16.mxu0 %v2138
      %2170 = vmatpush1.bf16.msra.mxu0 %v2137
      %2171 = vmatprep.subr.bf16.mxu0 %v2140
      %2172 = vmatpush1.bf16.msra.mxu0 %v2139
      %2173 = vmatprep.subr.bf16.mxu0 %v2142
      %2174 = vmatpush1.bf16.msra.mxu0 %v2141
      %2175 = vmatprep.subr.bf16.mxu0 %v2144
      %2176 = vmatpush1.bf16.msra.mxu0 %v2143
      %2177 = vmatprep.subr.bf16.mxu0 %v2146
      %2178 = vmatpush1.bf16.msra.mxu0 %v2145
      %2179 = vmatprep.subr.bf16.mxu0 %v2148
      %2180 = vmatpush1.bf16.msra.mxu0 %v2147
      %2181 = vmatprep.subr.bf16.mxu0 %v2150
      %2182 = vmatpush1.bf16.msra.mxu0 %v2149
      %2183 = vmatprep.subr.bf16.mxu0 0
      %2184 = vmatpush1.bf16.msra.mxu0 0
      %2185 = vmatprep.subr.bf16.mxu0 0
      %2186 = vmatpush1.bf16.msra.mxu0 0
      %2187 = vmatprep.subr.bf16.mxu0 0
      %2188 = vmatpush1.bf16.msra.mxu0 0
      %2189 = vmatprep.subr.bf16.mxu0 0
      %2190 = vmatpush1.bf16.msra.mxu0 0
      %2191 = vmatprep.subr.bf16.mxu0 0
      %2192 = vmatpush1.bf16.msra.mxu0 0
      %2193 = vmatprep.subr.bf16.mxu0 0
      %2194 = vmatpush1.bf16.msra.mxu0 0
      %2195 = vmatprep.subr.bf16.mxu0 0
      %2196 = vmatpush1.bf16.msra.mxu0 0
      %2197 = vmatprep.subr.bf16.mxu0 0
      %2198 = vmatpush1.bf16.msra.mxu0 0
      %2199 = vmatprep.mubr.bf16.mxu0 0
      %2200 = vmatmul.mubr.bf16.gmra.mrb[0].mxu0 %v1143
      %v2201 = vpop.f32.mrb[0].mxu0
      %v2202 = vadd.f32 %v2080, %v2201
      %v2203 = vpop.f32.mrb[0].mxu0
      %v2204 = vadd.f32 %v2084, %v2203
      %v2205 = vpop.f32.mrb[0].mxu0
      %v2206 = vadd.f32 %v2080, %v2205
      %v2207 = vpop.f32.mrb[0].mxu0
      %v2208 = vadd.f32 %v2084, %v2207
      %2209 = vmatprep.mubr.bf16.mxu0 0
      %2210 = vmatmul.mubr.bf16.gmra.mrb[0].mxu0 %v1144
      %v2211 = vpop.f32.mrb[0].mxu0
      %v2212 = vadd.f32 %v2080, %v2211
      %v2213 = vpop.f32.mrb[0].mxu0
      %v2214 = vadd.f32 %v2084, %v2213
      %v2215 = vpop.f32.mrb[0].mxu0
      %v2216 = vadd.f32 %v2080, %v2215
      %v2217 = vpop.f32.mrb[0].mxu0
      %v2218 = vadd.f32 %v2084, %v2217
      %2219 = vmatprep.mubr.bf16.mxu0 0
      %2220 = vmatmul.mubr.bf16.gmra.mrb[0].mxu0 %v1145
      %v2221 = vpop.f32.mrb[0].mxu0
      %v2222 = vadd.f32 %v2080, %v2221
      %v2223 = vpop.f32.mrb[0].mxu0
      %v2224 = vadd.f32 %v2084, %v2223
      %v2225 = vpop.f32.mrb[0].mxu0
      %v2226 = vadd.f32 %v2080, %v2225
      %v2227 = vpop.f32.mrb[0].mxu0
      %v2228 = vadd.f32 %v2084, %v2227
      %2229 = vmatprep.mubr.bf16.mxu0 0
      %2230 = vmatmul.mubr.bf16.gmra.mrb[0].mxu0 %v1146
      %v2231 = vpop.f32.mrb[0].mxu0
      %v2232 = vadd.f32 %v2080, %v2231
      %v2233 = vpop.f32.mrb[0].mxu0
      %v2234 = vadd.f32 %v2084, %v2233
      %v2235 = vpop.f32.mrb[0].mxu0
      %v2236 = vpop.f32.mrb[0].mxu0
      %2237 = vdwg.mxu0
      %v2238 = vmax.f32 %v2202, 0.0
      %v2239 = vmax.f32 %v2204, 0.0
      %v2240 = vmax.f32 %v2206, 0.0
      %v2241 = vmax.f32 %v2208, 0.0
      %v2242 = vmax.f32 %v2212, 0.0
      %v2243 = vmax.f32 %v2214, 0.0
      %v2244 = vmax.f32 %v2216, 0.0
      %v2245 = vmax.f32 %v2218, 0.0
      %v2246 = vmax.f32 %v2222, 0.0
      %v2247 = vmax.f32 %v2224, 0.0
      %v2248 = vmax.f32 %v2226, 0.0
      %v2249 = vmax.f32 %v2228, 0.0
      %v2250 = vmax.f32 %v2232, 0.0
      %v2251 = vmax.f32 %v2234, 0.0
      %v2252 = vpack.c.bf16 %v2240, %v2238
      %v2253 = vpack.c.bf16 %v2241, %v2239
      %v2254 = vpack.c.bf16 %v2244, %v2242
      %v2255 = vpack.c.bf16 %v2245, %v2243
      %v2256 = vpack.c.bf16 %v2248, %v2246
      %v2257 = vpack.c.bf16 %v2249, %v2247
      %v2258 = vpack.c.bf16 %v2250, %v2250
      %v2259 = vpack.c.bf16 %v2251, %v2251
      %v2260 = vld [vmem:[%s13] sm:$0xf]
      %v2261 = vld [vmem:[%s13 + $0x4] sm:$0xf]
      %v2262 = vld [vmem:[%s13 + $0x8] sm:$0xf]
      %v2263 = vld [vmem:[%s13 + $0xc] sm:$0xf]
      %v2264 = vld [vmem:[%s13 + $0x10] sm:$0xf]
      %v2265 = vld [vmem:[%s13 + $0x14] sm:$0xf]
      %v2266 = vld [vmem:[%s13 + $0x18] sm:$0xf]
      %v2267 = vld [vmem:[%s13 + $0x1c] sm:$0xf]
      %v2268 = vld [vmem:[%s13 + $0x20] sm:$0xf]
      %v2269 = vld [vmem:[%s13 + $0x24] sm:$0xf]
      %v2270 = vld [vmem:[%s13 + $0x28] sm:$0xf]
      %v2271 = vld [vmem:[%s13 + $0x2c] sm:$0xf]
      %v2272 = vld [vmem:[%s13 + $0x30] sm:$0xf]
      %v2273 = vld [vmem:[%s13 + $0x34] sm:$0xf]
      %v2274 = vld [vmem:[%s13 + $0x38] sm:$0xf]
      %v2275 = vld [vmem:[%s13 + $0x3c] sm:$0xf]
      %v2276 = vld [vmem:[%s13 + $0x40] sm:$0xf]
      %v2277 = vld [vmem:[%s13 + $0x44] sm:$0xf]
      %v2278 = vld [vmem:[%s13 + $0x48] sm:$0xf]
      %v2279 = vld [vmem:[%s13 + $0x4c] sm:$0xf]
      %v2280 = vld [vmem:[%s13 + $0x50] sm:$0xf]
      %v2281 = vld [vmem:[%s13 + $0x54] sm:$0xf]
      %v2282 = vld [vmem:[%s13 + $0x58] sm:$0xf]
      %v2283 = vld [vmem:[%s13 + $0x5c] sm:$0xf]
      %v2284 = vld [vmem:[%s13 + $0x60] sm:$0xf]
      %v2285 = vld [vmem:[%s13 + $0x64] sm:$0xf]
      %v2286 = vld [vmem:[%s13 + $0x68] sm:$0xf]
      %v2287 = vld [vmem:[%s13 + $0x6c] sm:$0xf]
      %v2288 = vld [vmem:[%s13 + $0x70] sm:$0xf]
      %v2289 = vld [vmem:[%s13 + $0x74] sm:$0xf]
      %v2290 = vld [vmem:[%s13 + $0x78] sm:$0xf]
      %v2291 = vld [vmem:[%s13 + $0x7c] sm:$0xf]
      %v2292 = vld [vmem:[%s14] sm:$0x1]
      %v2294 = vlaneseq
      %v2295 = vshrl.u32 %v2294, 7
      %v2296 = vsub.s32 0, %v2295
      %v2297 = vrot.slane %v2292, %v2296
      %v2331 = vunpack.c.l.b16 %v2260
      %v2332 = vunpack.c.l.b16 %v2261
      %v2333 = vunpack.c.l.b16 %v2262
      %v2334 = vunpack.c.l.b16 %v2263
      %v2335 = vunpack.c.l.b16 %v2264
      %v2336 = vunpack.c.l.b16 %v2265
      %v2337 = vunpack.c.l.b16 %v2266
      %v2338 = vunpack.c.l.b16 %v2267
      %v2339 = vunpack.c.l.b16 %v2268
      %v2340 = vunpack.c.l.b16 %v2269
      %v2341 = vunpack.c.l.b16 %v2270
      %v2342 = vunpack.c.l.b16 %v2271
      %v2343 = vunpack.c.l.b16 %v2272
      %v2344 = vunpack.c.l.b16 %v2273
      %v2345 = vunpack.c.l.b16 %v2274
      %v2346 = vunpack.c.l.b16 %v2275
      %v2347 = vunpack.c.l.b16 %v2276
      %v2348 = vunpack.c.l.b16 %v2277
      %v2349 = vunpack.c.l.b16 %v2278
      %v2350 = vunpack.c.l.b16 %v2279
      %v2351 = vunpack.c.l.b16 %v2280
      %v2352 = vunpack.c.l.b16 %v2281
      %v2353 = vunpack.c.l.b16 %v2282
      %v2354 = vunpack.c.l.b16 %v2283
      %v2355 = vunpack.c.l.b16 %v2284
      %v2356 = vunpack.c.l.b16 %v2285
      %v2357 = vunpack.c.l.b16 %v2286
      %v2358 = vunpack.c.l.b16 %v2287
      %v2359 = vunpack.c.l.b16 %v2288
      %v2360 = vunpack.c.l.b16 %v2289
      %v2361 = vunpack.c.l.b16 %v2290
      %v2362 = vunpack.c.l.b16 %v2291
      %v2363 = vpack.c.b16 %v2332, %v2331
      %v2364 = vpack.c.b16 %v2334, %v2333
      %v2365 = vpack.c.b16 %v2336, %v2335
      %v2366 = vpack.c.b16 %v2338, %v2337
      %v2367 = vpack.c.b16 %v2340, %v2339
      %v2368 = vpack.c.b16 %v2342, %v2341
      %v2369 = vpack.c.b16 %v2344, %v2343
      %v2370 = vpack.c.b16 %v2346, %v2345
      %v2371 = vpack.c.b16 %v2348, %v2347
      %v2372 = vpack.c.b16 %v2350, %v2349
      %v2373 = vpack.c.b16 %v2352, %v2351
      %v2374 = vpack.c.b16 %v2354, %v2353
      %v2375 = vpack.c.b16 %v2356, %v2355
      %v2376 = vpack.c.b16 %v2358, %v2357
      %v2377 = vpack.c.b16 %v2360, %v2359
      %v2378 = vpack.c.b16 %v2362, %v2361
      %2395 = vmatprep.subr.bf16.mxu0 0
      %2396 = vmatpush1.bf16.msra.mxu0 %v2363
      %2397 = vmatprep.subr.bf16.mxu0 0
      %2398 = vmatpush1.bf16.msra.mxu0 %v2364
      %2399 = vmatprep.subr.bf16.mxu0 0
      %2400 = vmatpush1.bf16.msra.mxu0 %v2365
      %2401 = vmatprep.subr.bf16.mxu0 0
      %2402 = vmatpush1.bf16.msra.mxu0 %v2366
      %2403 = vmatprep.subr.bf16.mxu0 0
      %2404 = vmatpush1.bf16.msra.mxu0 %v2367
      %2405 = vmatprep.subr.bf16.mxu0 0
      %2406 = vmatpush1.bf16.msra.mxu0 %v2368
      %2407 = vmatprep.subr.bf16.mxu0 0
      %2408 = vmatpush1.bf16.msra.mxu0 %v2369
      %2409 = vmatprep.subr.bf16.mxu0 0
      %2410 = vmatpush1.bf16.msra.mxu0 %v2370
      %2411 = vmatprep.subr.bf16.mxu0 0
      %2412 = vmatpush1.bf16.msra.mxu0 %v2371
      %2413 = vmatprep.subr.bf16.mxu0 0
      %2414 = vmatpush1.bf16.msra.mxu0 %v2372
      %2415 = vmatprep.subr.bf16.mxu0 0
      %2416 = vmatpush1.bf16.msra.mxu0 %v2373
      %2417 = vmatprep.subr.bf16.mxu0 0
      %2418 = vmatpush1.bf16.msra.mxu0 %v2374
      %2419 = vmatprep.subr.bf16.mxu0 0
      %2420 = vmatpush1.bf16.msra.mxu0 %v2375
      %2421 = vmatprep.subr.bf16.mxu0 0
      %2422 = vmatpush1.bf16.msra.mxu0 %v2376
      %2423 = vmatprep.subr.bf16.mxu0 0
      %2424 = vmatpush1.bf16.msra.mxu0 %v2377
      %2425 = vmatprep.subr.bf16.mxu0 0
      %2426 = vmatpush1.bf16.msra.mxu0 %v2378
      %2427 = vmatprep.mubr.bf16.mxu0 %v2253
      %2428 = vmatmul.mubr.bf16.gmra.mrb[0].mxu0 %v2252
      %v2429 = vpop.f32.mrb[0].mxu0
      %v2430 = vadd.f32 %v2297, %v2429
      %v2431 = vpop.f32.mrb[0].mxu0
      %v2432 = vpop.f32.mrb[0].mxu0
      %v2433 = vadd.f32 %v2297, %v2432
      %v2434 = vpop.f32.mrb[0].mxu0
      %2435 = vmatprep.mubr.bf16.mxu0 %v2255
      %2436 = vmatmul.mubr.bf16.gmra.mrb[0].mxu0 %v2254
      %v2437 = vpop.f32.mrb[0].mxu0
      %v2438 = vadd.f32 %v2297, %v2437
      %v2439 = vpop.f32.mrb[0].mxu0
      %v2440 = vpop.f32.mrb[0].mxu0
      %v2441 = vadd.f32 %v2297, %v2440
      %v2442 = vpop.f32.mrb[0].mxu0
      %2443 = vmatprep.mubr.bf16.mxu0 %v2257
      %2444 = vmatmul.mubr.bf16.gmra.mrb[0].mxu0 %v2256
      %v2445 = vpop.f32.mrb[0].mxu0
      %v2446 = vadd.f32 %v2297, %v2445
      %v2447 = vpop.f32.mrb[0].mxu0
      %v2448 = vpop.f32.mrb[0].mxu0
      %v2449 = vadd.f32 %v2297, %v2448
      %v2450 = vpop.f32.mrb[0].mxu0
      %2451 = vmatprep.mubr.bf16.mxu0 %v2259
      %2452 = vmatmul.mubr.bf16.gmra.mrb[0].mxu0 %v2258
      %v2453 = vpop.f32.mrb[0].mxu0
      %v2454 = vadd.f32 %v2297, %v2453
      %v2455 = vpop.f32.mrb[0].mxu0
      %v2456 = vpop.f32.mrb[0].mxu0
      %v2457 = vpop.f32.mrb[0].mxu0
      %2458 = vdwg.mxu0
      %v2459 = vadd.f32 %v1136, %v2430
      %v2460 = vadd.f32 %v1137, %v2433
      %v2461 = vadd.f32 %v1138, %v2438
      %v2462 = vadd.f32 %v1139, %v2441
      %v2463 = vadd.f32 %v1140, %v2446
      %v2464 = vadd.f32 %v1141, %v2449
      %v2465 = vadd.f32 %v1142, %v2454
      %2466 = vadd.xlane.f32.xlu0 %v2459
      %v2467 = vpop.xlane.xlu0 %2466
      %2468 = vadd.xlane.f32.xlu0 %v2460
      %v2469 = vpop.xlane.xlu0 %2468
      %2470 = vadd.xlane.f32.xlu0 %v2461
      %v2471 = vpop.xlane.xlu0 %2470
      %2472 = vadd.xlane.f32.xlu0 %v2462
      %v2473 = vpop.xlane.xlu0 %2472
      %2474 = vadd.xlane.f32.xlu0 %v2463
      %v2475 = vpop.xlane.xlu0 %2474
      %2476 = vadd.xlane.f32.xlu0 %v2464
      %v2477 = vpop.xlane.xlu0 %2476
      %2478 = vadd.xlane.f32.xlu0 %v2465
      %v2479 = vpop.xlane.xlu0 %2478
      %v2480 = vmul.f32 %v2467, %v1051
      %v2481 = vmul.f32 %v2469, %v1051
      %v2482 = vmul.f32 %v2471, %v1051
      %v2483 = vmul.f32 %v2473, %v1051
      %v2484 = vmul.f32 %v2475, %v1051
      %v2485 = vmul.f32 %v2477, %v1051
      %v2486 = vmul.f32 %v2479, %v1051
      %v2487 = vsub.f32 %v2459, %v2480
      %v2488 = vsub.f32 %v2460, %v2481
      %v2489 = vsub.f32 %v2461, %v2482
      %v2490 = vsub.f32 %v2462, %v2483
      %v2491 = vsub.f32 %v2463, %v2484
      %v2492 = vsub.f32 %v2464, %v2485
      %v2493 = vsub.f32 %v2465, %v2486
      %v2494 = vmul.f32 %v2487, %v2487
      %v2495 = vmul.f32 %v2488, %v2488
      %v2496 = vmul.f32 %v2489, %v2489
      %v2497 = vmul.f32 %v2490, %v2490
      %v2498 = vmul.f32 %v2491, %v2491
      %v2499 = vmul.f32 %v2492, %v2492
      %v2500 = vmul.f32 %v2493, %v2493
      %2501 = vadd.xlane.f32.xlu0 %v2494
      %v2502 = vpop.xlane.xlu0 %2501
      %2503 = vadd.xlane.f32.xlu0 %v2495
      %v2504 = vpop.xlane.xlu0 %2503
      %2505 = vadd.xlane.f32.xlu0 %v2496
      %v2506 = vpop.xlane.xlu0 %2505
      %2507 = vadd.xlane.f32.xlu0 %v2497
      %v2508 = vpop.xlane.xlu0 %2507
      %2509 = vadd.xlane.f32.xlu0 %v2498
      %v2510 = vpop.xlane.xlu0 %2509
      %2511 = vadd.xlane.f32.xlu0 %v2499
      %v2512 = vpop.xlane.xlu0 %2511
      %2513 = vadd.xlane.f32.xlu0 %v2500
      %v2514 = vpop.xlane.xlu0 %2513
      %v2515 = vmul.f32 %v2502, %v1051
      %v2516 = vmul.f32 %v2504, %v1051
      %v2517 = vmul.f32 %v2506, %v1051
      %v2518 = vmul.f32 %v2508, %v1051
      %v2519 = vmul.f32 %v2510, %v1051
      %v2520 = vmul.f32 %v2512, %v1051
      %v2521 = vmul.f32 %v2514, %v1051
      %v2522 = vadd.f32 %v2515, 1e-05
      %v2523 = vadd.f32 %v2516, 1e-05
      %v2524 = vadd.f32 %v2517, 1e-05
      %v2525 = vadd.f32 %v2518, 1e-05
      %v2526 = vadd.f32 %v2519, 1e-05
      %v2527 = vadd.f32 %v2520, 1e-05
      %v2528 = vadd.f32 %v2521, 1e-05
      %v2529 = vrsqrt.pop %v2522
      %v2530 = vrsqrt.pop %v2523
      %v2531 = vrsqrt.pop %v2524
      %v2532 = vrsqrt.pop %v2525
      %v2533 = vrsqrt.pop %v2526
      %v2534 = vrsqrt.pop %v2527
      %v2535 = vrsqrt.pop %v2528
      %v2536 = vmul.f32 %v2487, %v2529
      %v2537 = vmul.f32 %v2488, %v2530
      %v2538 = vmul.f32 %v2489, %v2531
      %v2539 = vmul.f32 %v2490, %v2532
      %v2540 = vmul.f32 %v2491, %v2533
      %v2541 = vmul.f32 %v2492, %v2534
      %v2542 = vmul.f32 %v2493, %v2535
      %v2543 = vld [vmem:[%s15] sm:$0x1]
      %v2545 = vlaneseq
      %v2546 = vshrl.u32 %v2545, 7
      %v2547 = vsub.s32 0, %v2546
      %v2548 = vrot.slane %v2543, %v2547
      %v2550 = vmul.f32 %v2536, %v2548
      %v2551 = vmul.f32 %v2537, %v2548
      %v2552 = vmul.f32 %v2538, %v2548
      %v2553 = vmul.f32 %v2539, %v2548
      %v2554 = vmul.f32 %v2540, %v2548
      %v2555 = vmul.f32 %v2541, %v2548
      %v2556 = vmul.f32 %v2542, %v2548
      %v2557 = vld [vmem:[%s16] sm:$0x1]
      %v2559 = vlaneseq
      %v2560 = vshrl.u32 %v2559, 7
      %v2561 = vsub.s32 0, %v2560
      %v2562 = vrot.slane %v2557, %v2561
      %v2564 = vadd.f32 %v2550, %v2562
      %v2565 = vadd.f32 %v2551, %v2562
      %v2566 = vadd.f32 %v2552, %v2562
      %v2567 = vadd.f32 %v2553, %v2562
      %v2568 = vadd.f32 %v2554, %v2562
      %v2569 = vadd.f32 %v2555, %v2562
      %v2570 = vadd.f32 %v2556, %v2562
      %2571 = vst [vmem:[%s597] sm:$0xff] %v2564
      %2572 = vst [vmem:[%s597 + $0x8] sm:$0xff] %v2565
      %2573 = vst [vmem:[%s597 + $0x10] sm:$0xff] %v2566
      %2574 = vst [vmem:[%s597 + $0x18] sm:$0xff] %v2567
      %2575 = vst [vmem:[%s597 + $0x20] sm:$0xff] %v2568
      %2576 = vst [vmem:[%s597 + $0x28] sm:$0xff] %v2569
      %2577 = vst [vmem:[%s597 + $0x30] sm:$0xff] %v2570
      %p2578 = scmp.lt.s32.totalorder %s30, 1
      %s2579 = scalar_select %p2578, %s30, 1
      %s2580 = smul.addr %s2579, 7
      %s2581 = smul.addr %s2580, 8
      %s2582 = scalar_lea.vmem %s17, %s2581
      %p2583 = scmp.lt.s32.totalorder %s30, 1
      %s2584 = scalar_select %p2583, %s30, 1
      %s2585 = smul.addr %s2584, 28
      %s2586 = smul.addr %s2585, 8
      %s2587 = scalar_lea.vmem %s18, %s2586
      // Predicated region
      $region89: #{encoder_1d_forward.1} parent=87 // pred_check
        %p2588 = pneg %p415
      $region90: #{encoder_1d_forward.1} parent=87 // pred_check_branch
        %2590 = sbr.rel (%p2588) target = $region92
      $region91: #{encoder_1d_forward.1} parent=87 // pred_region
        _
      $region92: #{encoder_1d_forward.1} parent=87 // pred_fallthru
        _
      // Predicated region
      $region93: #{encoder_1d_forward.1} parent=87 // pred_check
        %p2591 = pneg %p441
      $region94: #{encoder_1d_forward.1} parent=87 // pred_check_branch
        %2593 = sbr.rel (%p2591) target = $region96
      $region95: #{encoder_1d_forward.1} parent=87 // pred_region
        _
      $region96: #{encoder_1d_forward.1} parent=87 // pred_fallthru
        _
    $region88: #{encoder_1d_forward.1} parent=5 // pred_fallthru
      _
    %p2594 = scmp.le.s32.totalorder 2, %s25
    // Predicated region
    $region97: #{encoder_1d_forward.1} parent=5 // pred_check
      %p2595 = pneg %p2594
    $region98: #{encoder_1d_forward.1} parent=5 // pred_check_branch
      %2597 = sbr.rel (%p2595) target = $region100
    $region99: #{encoder_1d_forward.1} parent=5 // pred_region
      %s2598 = ssub.s32 %s25, 2
      // Predicated region
      $region101: #{encoder_1d_forward.1} parent=99 // pred_check
        %p2599 = pneg %p421
      $region102: #{encoder_1d_forward.1} parent=99 // pred_check_branch
        %2601 = sbr.rel (%p2599) target = $region104
      $region103: #{encoder_1d_forward.1} parent=99 // pred_region
        %p2602 = scmp.lt.s32.totalorder %s31, 1
        %s2603 = scalar_select %p2602, %s31, 1
        %s2604 = smul.addr %s2603, 7
        %s2605 = smul.addr %s2604, 8
        %s2606 = scalar_lea.vmem %s17, %s2605
      $region104: #{encoder_1d_forward.1} parent=99 // pred_fallthru
        _
      // Predicated region
      $region105: #{encoder_1d_forward.1} parent=99 // pred_check
        %p2607 = pneg %p447
      $region106: #{encoder_1d_forward.1} parent=99 // pred_check_branch
        %2609 = sbr.rel (%p2607) target = $region108
      $region107: #{encoder_1d_forward.1} parent=99 // pred_region
        %p2610 = scmp.lt.s32.totalorder %s31, 1
        %s2611 = scalar_select %p2610, %s31, 1
        %s2612 = smul.addr %s2611, 28
        %s2613 = smul.addr %s2612, 8
        %s2614 = scalar_lea.vmem %s18, %s2613
      $region108: #{encoder_1d_forward.1} parent=99 // pred_fallthru
        _
    $region100: #{encoder_1d_forward.1} parent=5 // pred_fallthru
      _
  $region6: #{encoder_1d_forward.1} parent=0 // loop_footer
    %s29 = sadd.s32 1, %s25
  $region7: #{encoder_1d_forward.1} parent=0 // loop_footer_branch
    %24 = sbr.rel target = $region3
  $region8: #{encoder_1d_forward.1} parent=0 // loop_exit
    _

</llo_original>
